<compile_context>
chip_gen: v5e
topology: v5e:2x2
jax: 0.10.0
libtpu: 0.0.40
codegen_flags: <defaults>
</compile_context>

<pallas_src>
import jax
import jax.numpy as jnp
from jax import lax
from jax.experimental import pallas as pl
from jax.experimental.pallas import tpu as pltpu

# ----------------------------- configuration -------------------------------
B = 2                    # demo batch
IN = 32                  # flattened input features  (input.size()[1:])
OUT = 16                 # out_size = (OUT,)
OUT_PAD = 128            # lane-dense output slab; valid output lanes are [:OUT]
K = 8                    # number of sparse index tuples produced by the hypernetwork
R = 2                    # w_rank = len(learn_cols)
NC = 2 ** R              # 4 floor/ceil integer neighbours per tuple
HYPER_W = (R + 2) * K    # hypernet head width: [m_out | m_in | sigma | value] = 32
TB = 8                   # batch tile (fills 8/8 sublanes); grid over padded batch

SIGMA_BOOST = 2.0
EPSILON = 1e-6

# Packed-parameter lane layout of the single (IN, OUT_PAD) weight/bias slab:
#   lanes [0, OUT)             -> dense-bias head  W_b / b_b
#   lanes [OUT, OUT + HYPER_W) -> hypernetwork head W_h / b_h
#   lanes [OUT + HYPER_W, 128) -> zero padding
assert OUT + HYPER_W <= OUT_PAD


# ------------------------------- kernel ------------------------------------
def hyperlayer_kernel(x_ref, w_ref, b_ref, o_ref):
    # x_ref : (TB, IN)        batch tile
    # w_ref : (IN, OUT_PAD)   packed weights (dense-bias head | hypernet head | 0-pad)
    # b_ref : (1, OUT_PAD)    packed biases
    # o_ref : (TB, OUT_PAD)   lane-dense output slab
    f32 = jnp.float32
    x = x_ref[...]                                                     # (TB, IN)

    # ---- ONE fused MXU matmul for both heads (hypernet + dense bias) -------
    fused = jnp.dot(x, w_ref[...], preferred_element_type=f32) + b_ref[...]  # (TB, OUT_PAD)
    res = fused[:, OUT:OUT + HYPER_W]                                  # (TB, (R+2)*K)

    # ---- split_out ----------------------------------------------------------
    m_out = jax.nn.sigmoid(res[:, 0:K]) * (OUT - 1.0)                  # (TB, K)
    m_in = jax.nn.sigmoid(res[:, K:2 * K]) * (IN - 1.0)                # (TB, K)
    sig = jax.nn.softplus(res[:, 2 * K:3 * K] + SIGMA_BOOST) + EPSILON
    vals = res[:, 3 * K:4 * K]                                         # (TB, K)
    s_out = sig * float(OUT)
    s_in = sig * float(IN)
    # exact divides: these sit inside the exp argument (approx error would amplify)
    inv_var_out = 1.0 / (s_out * s_out + EPSILON)                      # (TB, K)
    inv_var_in = 1.0 / (s_in * s_in + EPSILON)                         # (TB, K)

    # ---- discretize: 2^R floor/ceil combos via broadcasted selects ---------
    # combo order = itertools.product([True, False], repeat=2) (True = floor):
    #   0:(floor,floor) 1:(floor,ceil) 2:(ceil,floor) 3:(ceil,ceil)
    fo, co = jnp.floor(m_out), jnp.ceil(m_out)
    fi, ci = jnp.floor(m_in), jnp.ceil(m_in)
    combo = lax.broadcasted_iota(jnp.int32, (1, NC, 1), 1)             # combo id 0..NC-1
    out_floor = combo < 2
    in_floor = (combo % 2) == 0
    po = jnp.where(out_floor, fo[:, None, :], co[:, None, :])          # (TB, NC, K)
    pi = jnp.where(in_floor, fi[:, None, :], ci[:, None, :])           # (TB, NC, K)
    d_out = po - m_out[:, None, :]
    d_in = pi - m_in[:, None, :]

    # Gaussian densities of all integer neighbours: ONE exp push
    props = jnp.exp(-0.5 * (d_out * d_out * inv_var_out[:, None, :]
                            + d_in * d_in * inv_var_in[:, None, :]))   # (TB, NC, K)

    # normalisation: sum(props + EPS) over the 2^R neighbours (matches torch ref)
    tot = jnp.sum(props, axis=1, keepdims=True) + float(NC) * EPSILON  # (TB, 1, K)
    wgt = vals[:, None, :] * props * pl.reciprocal(tot, approx=True)   # (TB, NC, K)

    # ---- sparse batched matmul: masked-select gather / scatter (VPU + XLU) --
    pi_i = pi.astype(jnp.int32)
    po_i = po.astype(jnp.int32)
    lane_iota = lax.broadcasted_iota(jnp.int32, (1, 1, 1, OUT_PAD), 3)  # shared iota

    # gather x[b, pi]: masked select + lane reduce (no f32 one-hot temporaries)
    xg = jnp.sum(jnp.where(pi_i[..., None] == lane_iota[..., :IN],
                           x[:, None, None, :], 0.0), axis=3)           # (TB, NC, K)
    contrib = wgt * xg                                                  # (TB, NC, K)

    # scatter-add into y[b, po]: masked select + reduce over neighbours & tuples
    y = jnp.sum(jnp.where(po_i[..., None] == lane_iota,
                          contrib[..., None], 0.0), axis=(1, 2))        # (TB, OUT_PAD)

    # Bias.DENSE.  Lanes >= OUT carry hypernet `res` (sliced off by the wrapper);
    # lane-dense 128-wide unmasked store.
    o_ref[...] = y + fused


# ------------------------------- wrapper ------------------------------------
def hyperlayer_forward(x, w_pack, b_pack):
    bsz = x.shape[0]
    b_pad = ((bsz + TB - 1) // TB) * TB
    if b_pad != bsz:
        x = jnp.pad(x, ((0, b_pad - bsz), (0, 0)))
    y_pad = pl.pallas_call(
        hyperlayer_kernel,
        out_shape=jax.ShapeDtypeStruct((b_pad, OUT_PAD), jnp.float32),
        grid_spec=pltpu.PrefetchScalarGridSpec(
            num_scalar_prefetch=0,
            grid=(b_pad // TB,),
            in_specs=[
                pl.BlockSpec((TB, IN), lambda i: (i, 0)),        # stream batch tiles
                pl.BlockSpec((IN, OUT_PAD), lambda i: (0, 0)),   # weights stay resident
                pl.BlockSpec((1, OUT_PAD), lambda i: (0, 0)),    # biases stay resident
            ],
            out_specs=pl.BlockSpec((TB, OUT_PAD), lambda i: (i, 0)),
        ),
        compiler_params=pltpu.CompilerParams(
            dimension_semantics=("parallel",)),
    )(x, w_pack, b_pack)
    return y_pad[:bsz, :OUT]


# ------------------------ pure-JAX reference (check) ------------------------
def hyperlayer_reference(x, w_pack, b_pack):
    fused = x @ w_pack + b_pack
    res = fused[:, OUT:OUT + HYPER_W]
    bias = fused[:, :OUT]
    m_out = jax.nn.sigmoid(res[:, 0:K]) * (OUT - 1.0)
    m_in = jax.nn.sigmoid(res[:, K:2 * K]) * (IN - 1.0)
    sig = jax.nn.softplus(res[:, 2 * K:3 * K] + SIGMA_BOOST) + EPSILON
    vals = res[:, 3 * K:4 * K]
    s_out = sig * float(OUT)
    s_in = sig * float(IN)
    fo, co = jnp.floor(m_out), jnp.ceil(m_out)
    fi, ci = jnp.floor(m_in), jnp.ceil(m_in)
    combos = [(fo, fi), (fo, ci), (co, fi), (co, ci)]
    props = [jnp.exp(-0.5 * ((p_o - m_out) ** 2 / (s_out * s_out + EPSILON)
                             + (p_i - m_in) ** 2 / (s_in * s_in + EPSILON)))
             for p_o, p_i in combos]
    total = props[0] + props[1] + props[2] + props[3] + float(NC) * EPSILON
    y = jnp.zeros((x.shape[0], OUT), jnp.float32)
    for (p_o, p_i), p in zip(combos, props):
        w = vals * p / total
        xg = jnp.take_along_axis(x, p_i.astype(jnp.int32), axis=1)
        contrib = w * xg
        oh = (p_o.astype(jnp.int32)[:, :, None]
              == jnp.arange(OUT, dtype=jnp.int32)[None, None, :]).astype(jnp.float32)
        y = y + jnp.einsum("bk,bko->bo", contrib, oh)
    return y + bias


# --------------------------------- main --------------------------------------
if __name__ == "__main__":
    key = jax.random.PRNGKey(0)
    k1, k2, k3, k4, kx = jax.random.split(key, 5)

    # Deterministic "hypernetwork" parameters (glue weights, channel-major).
    W_h = 0.1 * jax.random.normal(k1, (IN, HYPER_W), jnp.float32)
    b_h = 0.1 * jax.random.normal(k2, (1, HYPER_W), jnp.float32)
    W_b = 0.1 * jax.random.normal(k3, (IN, OUT), jnp.float32)
    b_b = 0.1 * jax.random.normal(k4, (1, OUT), jnp.float32)

    # Pack both heads into one lane-dense (IN, 128) slab (see layout comment above).
    W_pack = (jnp.zeros((IN, OUT_PAD), jnp.float32)
              .at[:, :OUT].set(W_b)
              .at[:, OUT:OUT + HYPER_W].set(W_h))
    b_pack = (jnp.zeros((1, OUT_PAD), jnp.float32)
              .at[:, :OUT].set(b_b)
              .at[:, OUT:OUT + HYPER_W].set(b_h))

    x = jax.random.normal(kx, (B, IN), jnp.float32)

    y = hyperlayer_forward(x, W_pack, b_pack)
    y = jax.block_until_ready(y)

    assert y.shape == (B, OUT)
    assert bool(jnp.all(jnp.isfinite(y)))

    # Correctness check vs plain-JAX reference.  Only the post-exp normalisation
    # uses the approx EUP reciprocal, so the tolerance is tight.
    y_ref = hyperlayer_reference(x, W_pack, b_pack)
    assert bool(jnp.allclose(y, y_ref, rtol=5e-3, atol=5e-4))

    print("KERNEL_OK")
</pallas_src>

<mosaic_0001>
module attributes {stable_mosaic.version = 11 : i64} {
  func.func @hyperlayer_kernel(%arg0: i32, %arg1: memref<8x32xf32, #tpu.memory_space<vmem>>, %arg2: memref<32x128xf32, #tpu.memory_space<vmem>>, %arg3: memref<1x128xf32, #tpu.memory_space<vmem>>, %arg4: memref<8x128xf32, #tpu.memory_space<vmem>>) attributes {dimension_semantics = [#tpu.dimension_semantics<parallel>], iteration_bounds = array<i64: 1>, scalar_prefetch = 0 : i64, scratch_operands = 0 : i64, tpu.core_type = #tpu.core_type<tc>, window_params = [{transform_indices = @transform_0, window_bounds = array<i64: 8, 32>}, {pipeline_mode = #tpu.pipeline_mode<synchronous>, transform_indices = @transform_1, window_bounds = array<i64: 32, 128>}, {pipeline_mode = #tpu.pipeline_mode<synchronous>, transform_indices = @transform_2, window_bounds = array<i64: 1, 128>}, {transform_indices = @transform_3, window_bounds = array<i64: 8, 128>}]} {
    %c0 = arith.constant 0 : index
    %c0_0 = arith.constant 0 : index
    %0 = vector.load %arg1[%c0, %c0_0] : memref<8x32xf32, #tpu.memory_space<vmem>>, vector<8x32xf32>
    %c0_1 = arith.constant 0 : index
    %c0_2 = arith.constant 0 : index
    %1 = vector.load %arg2[%c0_1, %c0_2] : memref<32x128xf32, #tpu.memory_space<vmem>>, vector<32x128xf32>
    %cst = arith.constant dense<0.000000e+00> : vector<8x128xf32>
    %2 = tpu.matmul %0, %1, %cst {dimension_numbers = #tpu.dot_dimension_numbers<[1], [0], [0], [1], [0, 0, 1, 1], [], []>} : vector<8x32xf32>, vector<32x128xf32>, vector<8x128xf32> -> vector<8x128xf32>
    %c0_3 = arith.constant 0 : index
    %c0_4 = arith.constant 0 : index
    %3 = vector.load %arg3[%c0_3, %c0_4] : memref<1x128xf32, #tpu.memory_space<vmem>>, vector<1x128xf32>
    %4 = vector.broadcast %3 : vector<1x128xf32> to vector<8x128xf32>
    %5 = arith.addf %2, %4 : vector<8x128xf32>
    %6 = vector.extract_strided_slice %5 {offsets = [0, 16], sizes = [8, 32], strides = [1, 1]} : vector<8x128xf32> to vector<8x32xf32>
    %7 = vector.extract_strided_slice %6 {offsets = [0, 0], sizes = [8, 8], strides = [1, 1]} : vector<8x32xf32> to vector<8x8xf32>
    %8 = arith.negf %7 : vector<8x8xf32>
    %9 = math.exp %8 : vector<8x8xf32>
    %cst_5 = arith.constant 1.000000e+00 : f32
    %10 = vector.broadcast %cst_5 : f32 to vector<8x8xf32>
    %11 = arith.addf %10, %9 : vector<8x8xf32>
    %12 = arith.divf %10, %11 : vector<8x8xf32>
    %cst_6 = arith.constant 1.500000e+01 : f32
    %13 = vector.broadcast %cst_6 : f32 to vector<8x8xf32>
    %14 = arith.mulf %12, %13 : vector<8x8xf32>
    %15 = vector.extract_strided_slice %6 {offsets = [0, 8], sizes = [8, 8], strides = [1, 1]} : vector<8x32xf32> to vector<8x8xf32>
    %16 = arith.negf %15 : vector<8x8xf32>
    %17 = math.exp %16 : vector<8x8xf32>
    %cst_7 = arith.constant 1.000000e+00 : f32
    %18 = vector.broadcast %cst_7 : f32 to vector<8x8xf32>
    %19 = arith.addf %18, %17 : vector<8x8xf32>
    %20 = arith.divf %18, %19 : vector<8x8xf32>
    %cst_8 = arith.constant 3.100000e+01 : f32
    %21 = vector.broadcast %cst_8 : f32 to vector<8x8xf32>
    %22 = arith.mulf %20, %21 : vector<8x8xf32>
    %23 = vector.extract_strided_slice %6 {offsets = [0, 16], sizes = [8, 8], strides = [1, 1]} : vector<8x32xf32> to vector<8x8xf32>
    %cst_9 = arith.constant 2.000000e+00 : f32
    %24 = vector.broadcast %cst_9 : f32 to vector<8x8xf32>
    %25 = arith.addf %23, %24 : vector<8x8xf32>
    %cst_10 = arith.constant 0.000000e+00 : f32
    %26 = vector.broadcast %cst_10 : f32 to vector<8x8xf32>
    %27 = arith.maximumf %25, %26 : vector<8x8xf32>
    %28 = vector.broadcast %cst_10 : f32 to vector<8x8xf32>
    %29 = arith.subf %25, %28 : vector<8x8xf32>
    %30 = arith.cmpf one, %29, %29 : vector<8x8xf32>
    %31 = vector.broadcast %cst_10 : f32 to vector<8x8xf32>
    %32 = arith.addf %25, %31 : vector<8x8xf32>
    %33 = math.absf %29 : vector<8x8xf32>
    %cst_11 = arith.constant 0.000000e+00 : f32
    %34 = vector.broadcast %cst_11 : f32 to vector<8x8xf32>
    %35 = arith.subf %34, %33 : vector<8x8xf32>
    %36 = math.exp %35 : vector<8x8xf32>
    %37 = math.log1p %36 : vector<8x8xf32>
    %38 = arith.addf %27, %37 : vector<8x8xf32>
    %39 = arith.select %30, %32, %38 : vector<8x8xi1>, vector<8x8xf32>
    %cst_12 = arith.constant 9.99999997E-7 : f32
    %40 = vector.broadcast %cst_12 : f32 to vector<8x8xf32>
    %41 = arith.addf %39, %40 : vector<8x8xf32>
    %42 = vector.extract_strided_slice %6 {offsets = [0, 24], sizes = [8, 8], strides = [1, 1]} : vector<8x32xf32> to vector<8x8xf32>
    %cst_13 = arith.constant 1.600000e+01 : f32
    %43 = vector.broadcast %cst_13 : f32 to vector<8x8xf32>
    %44 = arith.mulf %41, %43 : vector<8x8xf32>
    %cst_14 = arith.constant 3.200000e+01 : f32
    %45 = vector.broadcast %cst_14 : f32 to vector<8x8xf32>
    %46 = arith.mulf %41, %45 : vector<8x8xf32>
    %47 = arith.mulf %44, %44 : vector<8x8xf32>
    %cst_15 = arith.constant 9.99999997E-7 : f32
    %48 = vector.broadcast %cst_15 : f32 to vector<8x8xf32>
    %49 = arith.addf %47, %48 : vector<8x8xf32>
    %cst_16 = arith.constant 1.000000e+00 : f32
    %50 = vector.broadcast %cst_16 : f32 to vector<8x8xf32>
    %51 = arith.divf %50, %49 : vector<8x8xf32>
    %52 = arith.mulf %46, %46 : vector<8x8xf32>
    %cst_17 = arith.constant 9.99999997E-7 : f32
    %53 = vector.broadcast %cst_17 : f32 to vector<8x8xf32>
    %54 = arith.addf %52, %53 : vector<8x8xf32>
    %cst_18 = arith.constant 1.000000e+00 : f32
    %55 = vector.broadcast %cst_18 : f32 to vector<8x8xf32>
    %56 = arith.divf %55, %54 : vector<8x8xf32>
    %57 = math.floor %14 : vector<8x8xf32>
    %58 = math.ceil %14 : vector<8x8xf32>
    %59 = math.floor %22 : vector<8x8xf32>
    %60 = math.ceil %22 : vector<8x8xf32>
    %61 = tpu.iota {dimensions = array<i32: 1>} : vector<1x4x1xi32>
    %c2_i32 = arith.constant 2 : i32
    %62 = vector.broadcast %c2_i32 : i32 to vector<1x4x1xi32>
    %63 = arith.cmpi slt, %61, %62 : vector<1x4x1xi32>
    %c2_i32_19 = arith.constant 2 : i32
    %c0_i32 = arith.constant 0 : i32
    %64 = arith.cmpi eq, %c2_i32_19, %c0_i32 : i32
    %c1_i32 = arith.constant 1 : i32
    %65 = arith.select %64, %c1_i32, %c2_i32_19 : i32
    %66 = vector.broadcast %65 : i32 to vector<1x4x1xi32>
    %67 = arith.remsi %61, %66 : vector<1x4x1xi32>
    %c0_i32_20 = arith.constant 0 : i32
    %68 = vector.broadcast %c0_i32_20 : i32 to vector<1x4x1xi32>
    %69 = arith.cmpi ne, %67, %68 : vector<1x4x1xi32>
    %c0_i32_21 = arith.constant 0 : i32
    %70 = vector.broadcast %c0_i32_21 : i32 to vector<1x4x1xi32>
    %71 = arith.cmpi slt, %67, %70 : vector<1x4x1xi32>
    %c0_i32_22 = arith.constant 0 : i32
    %72 = arith.cmpi slt, %65, %c0_i32_22 : i32
    %73 = vector.broadcast %72 : i1 to vector<1x4x1xi1>
    %74 = vector.broadcast %73 : vector<1x4x1xi1> to vector<1x4x1xi1>
    %75 = arith.xori %71, %74 : vector<1x4x1xi1>
    %76 = arith.andi %75, %69 : vector<1x4x1xi1>
    %77 = vector.broadcast %65 : i32 to vector<1x4x1xi32>
    %78 = arith.addi %67, %77 : vector<1x4x1xi32>
    %79 = arith.select %76, %78, %67 : vector<1x4x1xi1>, vector<1x4x1xi32>
    %c0_i32_23 = arith.constant 0 : i32
    %80 = vector.broadcast %c0_i32_23 : i32 to vector<1x4x1xi32>
    %81 = arith.cmpi eq, %79, %80 : vector<1x4x1xi32>
    %82 = vector.shape_cast %57 : vector<8x8xf32> to vector<8x1x8xf32>
    %83 = vector.shape_cast %58 : vector<8x8xf32> to vector<8x1x8xf32>
    %84 = vector.shape_cast %63 : vector<1x4x1xi1> to vector<1x4x1xi1>
    %85 = vector.broadcast %84 : vector<1x4x1xi1> to vector<8x4x8xi1>
    %86 = vector.shape_cast %82 : vector<8x1x8xf32> to vector<8x1x8xf32>
    %87 = vector.broadcast %86 : vector<8x1x8xf32> to vector<8x4x8xf32>
    %88 = vector.shape_cast %83 : vector<8x1x8xf32> to vector<8x1x8xf32>
    %89 = vector.broadcast %88 : vector<8x1x8xf32> to vector<8x4x8xf32>
    %90 = arith.select %85, %87, %89 : vector<8x4x8xi1>, vector<8x4x8xf32>
    %91 = vector.shape_cast %59 : vector<8x8xf32> to vector<8x1x8xf32>
    %92 = vector.shape_cast %60 : vector<8x8xf32> to vector<8x1x8xf32>
    %93 = vector.shape_cast %81 : vector<1x4x1xi1> to vector<1x4x1xi1>
    %94 = vector.broadcast %93 : vector<1x4x1xi1> to vector<8x4x8xi1>
    %95 = vector.shape_cast %91 : vector<8x1x8xf32> to vector<8x1x8xf32>
    %96 = vector.broadcast %95 : vector<8x1x8xf32> to vector<8x4x8xf32>
    %97 = vector.shape_cast %92 : vector<8x1x8xf32> to vector<8x1x8xf32>
    %98 = vector.broadcast %97 : vector<8x1x8xf32> to vector<8x4x8xf32>
    %99 = arith.select %94, %96, %98 : vector<8x4x8xi1>, vector<8x4x8xf32>
    %100 = vector.shape_cast %14 : vector<8x8xf32> to vector<8x1x8xf32>
    %101 = vector.broadcast %100 : vector<8x1x8xf32> to vector<8x4x8xf32>
    %102 = arith.subf %90, %101 : vector<8x4x8xf32>
    %103 = vector.shape_cast %22 : vector<8x8xf32> to vector<8x1x8xf32>
    %104 = vector.broadcast %103 : vector<8x1x8xf32> to vector<8x4x8xf32>
    %105 = arith.subf %99, %104 : vector<8x4x8xf32>
    %106 = arith.mulf %102, %102 : vector<8x4x8xf32>
    %107 = vector.shape_cast %51 : vector<8x8xf32> to vector<8x1x8xf32>
    %108 = vector.broadcast %107 : vector<8x1x8xf32> to vector<8x4x8xf32>
    %109 = arith.mulf %106, %108 : vector<8x4x8xf32>
    %110 = arith.mulf %105, %105 : vector<8x4x8xf32>
    %111 = vector.shape_cast %56 : vector<8x8xf32> to vector<8x1x8xf32>
    %112 = vector.broadcast %111 : vector<8x1x8xf32> to vector<8x4x8xf32>
    %113 = arith.mulf %110, %112 : vector<8x4x8xf32>
    %114 = arith.addf %109, %113 : vector<8x4x8xf32>
    %cst_24 = arith.constant -5.000000e-01 : f32
    %115 = vector.broadcast %cst_24 : f32 to vector<8x4x8xf32>
    %116 = arith.mulf %115, %114 : vector<8x4x8xf32>
    %117 = math.exp %116 : vector<8x4x8xf32>
    %cst_25 = arith.constant dense<0.000000e+00> : vector<8x8xf32>
    %118 = vector.multi_reduction <add>, %117, %cst_25 [1] : vector<8x4x8xf32> to vector<8x8xf32>
    %119 = vector.shape_cast %118 : vector<8x8xf32> to vector<8x1x8xf32>
    %cst_26 = arith.constant 4.000000e-06 : f32
    %120 = vector.broadcast %cst_26 : f32 to vector<8x1x8xf32>
    %121 = arith.addf %119, %120 : vector<8x1x8xf32>
    %122 = vector.shape_cast %42 : vector<8x8xf32> to vector<8x1x8xf32>
    %123 = vector.broadcast %122 : vector<8x1x8xf32> to vector<8x4x8xf32>
    %124 = arith.mulf %123, %117 : vector<8x4x8xf32>
    %125 = tpu.reciprocal %121 {approx = true} : vector<8x1x8xf32> -> vector<8x1x8xf32>
    %126 = vector.broadcast %125 : vector<8x1x8xf32> to vector<8x4x8xf32>
    %127 = arith.mulf %124, %126 : vector<8x4x8xf32>
    %128 = arith.fptosi %99 : vector<8x4x8xf32> to vector<8x4x8xi32>
    %129 = arith.fptosi %90 : vector<8x4x8xf32> to vector<8x4x8xi32>
    %130 = tpu.iota {dimensions = array<i32: 3>} : vector<1x1x1x128xi32>
    %131 = vector.shape_cast %128 : vector<8x4x8xi32> to vector<8x4x8x1xi32>
    %132 = vector.extract_strided_slice %130 {offsets = [0, 0, 0, 0], sizes = [1, 1, 1, 32], strides = [1, 1, 1, 1]} : vector<1x1x1x128xi32> to vector<1x1x1x32xi32>
    %133 = vector.broadcast %131 : vector<8x4x8x1xi32> to vector<8x4x8x32xi32>
    %134 = vector.broadcast %132 : vector<1x1x1x32xi32> to vector<8x4x8x32xi32>
    %135 = arith.cmpi eq, %133, %134 : vector<8x4x8x32xi32>
    %136 = vector.shape_cast %0 : vector<8x32xf32> to vector<8x1x1x32xf32>
    %cst_27 = arith.constant 0.000000e+00 : f32
    %137 = vector.shape_cast %136 : vector<8x1x1x32xf32> to vector<8x1x1x32xf32>
    %138 = vector.broadcast %137 : vector<8x1x1x32xf32> to vector<8x4x8x32xf32>
    %139 = vector.broadcast %cst_27 : f32 to vector<8x4x8x32xf32>
    %140 = arith.select %135, %138, %139 : vector<8x4x8x32xi1>, vector<8x4x8x32xf32>
    %cst_28 = arith.constant dense<0.000000e+00> : vector<8x4x8xf32>
    %141 = vector.multi_reduction <add>, %140, %cst_28 [3] : vector<8x4x8x32xf32> to vector<8x4x8xf32>
    %142 = arith.mulf %127, %141 : vector<8x4x8xf32>
    %143 = vector.shape_cast %129 : vector<8x4x8xi32> to vector<8x4x8x1xi32>
    %144 = vector.broadcast %143 : vector<8x4x8x1xi32> to vector<8x4x8x128xi32>
    %145 = vector.broadcast %130 : vector<1x1x1x128xi32> to vector<8x4x8x128xi32>
    %146 = arith.cmpi eq, %144, %145 : vector<8x4x8x128xi32>
    %147 = vector.shape_cast %142 : vector<8x4x8xf32> to vector<8x4x8x1xf32>
    %cst_29 = arith.constant 0.000000e+00 : f32
    %148 = vector.shape_cast %147 : vector<8x4x8x1xf32> to vector<8x4x8x1xf32>
    %149 = vector.broadcast %148 : vector<8x4x8x1xf32> to vector<8x4x8x128xf32>
    %150 = vector.broadcast %cst_29 : f32 to vector<8x4x8x128xf32>
    %151 = arith.select %146, %149, %150 : vector<8x4x8x128xi1>, vector<8x4x8x128xf32>
    %cst_30 = arith.constant dense<0.000000e+00> : vector<8x128xf32>
    %152 = vector.multi_reduction <add>, %151, %cst_30 [1, 2] : vector<8x4x8x128xf32> to vector<8x128xf32>
    %153 = arith.addf %152, %5 : vector<8x128xf32>
    %c0_31 = arith.constant 0 : index
    %c0_32 = arith.constant 0 : index
    %154 = vector.load %arg4[%c0_31, %c0_32] : memref<8x128xf32, #tpu.memory_space<vmem>>, vector<8x128xf32>
    tpu.vector_store %arg4[%c0_31, %c0_32], %153 {strides = array<i32>} : memref<8x128xf32, #tpu.memory_space<vmem>>, vector<8x128xf32>,
    return
  }
  func.func @transform_0(%arg0: i32) -> (i32, i32) {
    %c0_i32 = arith.constant 0 : i32
    %c0_i32_0 = arith.constant 0 : i32
    return %arg0, %c0_i32 : i32, i32
  }
  func.func @transform_1(%arg0: i32) -> (i32, i32) {
    %c0_i32 = arith.constant 0 : i32
    %c0_i32_0 = arith.constant 0 : i32
    %c0_i32_1 = arith.constant 0 : i32
    return %c0_i32, %c0_i32_0 : i32, i32
  }
  func.func @transform_2(%arg0: i32) -> (i32, i32) {
    %c0_i32 = arith.constant 0 : i32
    %c0_i32_0 = arith.constant 0 : i32
    %c0_i32_1 = arith.constant 0 : i32
    return %c0_i32, %c0_i32_0 : i32, i32
  }
  func.func @transform_3(%arg0: i32) -> (i32, i32) {
    %c0_i32 = arith.constant 0 : i32
    %c0_i32_0 = arith.constant 0 : i32
    return %arg0, %c0_i32 : i32, i32
  }
}

</mosaic_0001>

<llo_original>
// kernel: tpu_custom_call.1
$region0: #{tpu_custom_call.1}
  #allocation0 [shape = 'u32[]', space=smem, size = 0x4, offset = 0x4, fixed_abs, tag = 'smem constant byte address 0x4 - core index']
  #allocation1 [shape = 'u32[72,128]{1,0:T(1,128)}', space=vmem, size = 0x9000, scoped, tag = 'internal scratch']
  %s0 = inlined_call_operand.hbm [shape: f32[8,32], index: 0, kind: input, shape index: {}]
  %s1 = inlined_call_operand.hbm [shape: f32[32,128], index: 1, kind: input, shape index: {}]
  %s2 = inlined_call_operand.vmem [shape: f32[1,128], index: 2, kind: input, shape index: {}]
  %s3 = inlined_call_operand.hbm [shape: f32[8,128], index: 3, kind: output, shape index: {}]
  %s4 = sld [smem:[#allocation0]]
  $region30: #{tpu_custom_call.1} parent=0
    _
  %s6 = ssub.s32 1, %s4
  %s7 = scalar_select 0, %s6, %s4
  $region1: #{tpu_custom_call.1} parent=0
    #allocation2 [shape = 'u8[4096]{0}', space=vmem, size = 0x1000, scoped, tag = 'input window, operand 0, single buffered']
    #allocation3 [shape = 's32[1]{0}', space=sflag, size = 0x4, scoped, tag = 'scoped memory for tpu_custom_call.1']
    #allocation4 [shape = 's32[1]{0}', space=sflag, size = 0x4, scoped, tag = 'scoped memory for tpu_custom_call.1']
    #allocation5 [shape = 'u8[16384]{0}', space=vmem, size = 0x4000, scoped, tag = 'input window, operand 1, single buffered']
    #allocation6 [shape = 's32[1]{0}', space=sflag, size = 0x4, scoped, tag = 'scoped memory for tpu_custom_call.1']
    #allocation7 [shape = 'u8[4096]{0}', space=vmem, size = 0x1000, scoped, tag = 'output window, operand 0, single buffered']
    %8 = vsyncpa [#allocation3], 0
    %9 = vsyncpa [#allocation6], 0
    %10 = vsyncpa [#allocation4], 0
    // Predicated region
    $region2: #{tpu_custom_call.1} parent=1 // pred_check
      _
    $region3: #{tpu_custom_call.1} parent=1 // pred_check_branch
      %12 = sbr.rel (0) target = $region5
    $region4: #{tpu_custom_call.1} parent=1 // pred_region
      %14 = vsyncadd [#allocation3], 0
      %s16 = sshll.u32 %s0, 4
      %s17 = int_to_ptr.hbm [resolvable:$true] %s16
      %s18 = sshll.u32 [#allocation2], 4
      %s19 = int_to_ptr.vmem [resolvable:$true] %s18
      %21 = dma.hbm_to_vmem [thread:$0]  %s17, 128, %s19, [#allocation3]
    $region5: #{tpu_custom_call.1} parent=1 // pred_fallthru
      _
    // Predicated region
    $region6: #{tpu_custom_call.1} parent=1 // pred_check
      _
    $region7: #{tpu_custom_call.1} parent=1 // pred_check_branch
      %23 = sbr.rel (0) target = $region9
    $region8: #{tpu_custom_call.1} parent=1 // pred_region
      %25 = vsyncadd [#allocation6], 0
      %s26 = sshll.u32 %s1, 4
      %s27 = int_to_ptr.hbm [resolvable:$true] %s26
      %s28 = sshll.u32 [#allocation5], 4
      %s29 = int_to_ptr.vmem [resolvable:$true] %s28
      %34 = dma.hbm_to_vmem [thread:$0]  %s27, 512, %s29, [#allocation6], 128, 128, 8
    $region9: #{tpu_custom_call.1} parent=1 // pred_fallthru
      _
    // Predicated region
    $region10: #{tpu_custom_call.1} parent=1 // pred_check
      _
    $region11: #{tpu_custom_call.1} parent=1 // pred_check_branch
      %36 = sbr.rel (0) target = $region13
    $region12: #{tpu_custom_call.1} parent=1 // pred_region
      _
    $region13: #{tpu_custom_call.1} parent=1 // pred_fallthru
      _
    // Predicated region
    $region14: #{tpu_custom_call.1} parent=1 // pred_check
      _
    $region15: #{tpu_custom_call.1} parent=1 // pred_check_branch
      %38 = sbr.rel (0) target = $region17
    $region16: #{tpu_custom_call.1} parent=1 // pred_region
      %40 = dma.done [#allocation3], 128
    $region17: #{tpu_custom_call.1} parent=1 // pred_fallthru
      _
    // Predicated region
    $region18: #{tpu_custom_call.1} parent=1 // pred_check
      _
    $region19: #{tpu_custom_call.1} parent=1 // pred_check_branch
      %42 = sbr.rel (0) target = $region21
    $region20: #{tpu_custom_call.1} parent=1 // pred_region
      %44 = dma.done [#allocation6], 512
    $region21: #{tpu_custom_call.1} parent=1 // pred_fallthru
      _
    %v45 = vld [vmem:[#allocation2] sm:$0xff]
    %v46 = vld [vmem:[#allocation5] sm:$0xff]
    %v47 = vld [vmem:[#allocation5 + $0x8] sm:$0xff]
    %v48 = vld [vmem:[#allocation5 + $0x10] sm:$0xff]
    %v49 = vld [vmem:[#allocation5 + $0x18] sm:$0xff]
    %v50 = vld [vmem:[%s2] sm:$0x1]
    %v52 = vperm.slane %v50, 0
    %vm54 = vcmask 261120
    %v56 = vsel %vm54, %v45, 0
    %58 = vmatpush.msra.mxu0 0.0
    %59 = vmatpush.msra.mxu0 0.0
    %60 = vmatpush.msra.mxu0 0.0
    %61 = vmatpush.msra.mxu0 0.0
    %62 = vmatpush.msra.mxu0 0.0
    %63 = vmatpush.msra.mxu0 0.0
    %64 = vmatpush.msra.mxu0 0.0
    %65 = vmatpush.msra.mxu0 0.0
    %66 = vmatpush.msra.mxu0 0.0
    %67 = vmatpush.msra.mxu0 0.0
    %68 = vmatpush.msra.mxu0 0.0
    %69 = vmatpush.msra.mxu0 0.0
    %70 = vmatpush.msra.mxu0 %v49
    %71 = vmatpush.msra.mxu0 %v48
    %72 = vmatpush.msra.mxu0 %v47
    %73 = vmatpush.msra.mxu0 %v46
    %74 = vmatmul.f32.gmra.mxu0 %v56
    %v75 = vpop.f32.mrf.mxu0
    %v76 = vadd.f32 %v52, %v75
    %77 = vdwg.mxu0
    %v78 = vxor.u32 %v76, 2147483648
    %v79 = vmul.f32 %v78, 1.442695
    %v80 = vpow.pop %v79
    %v81 = vadd.f32 %v80, 1.0
    %v82 = vrcp.pop %v81
    %v83 = vmul.f32 %v81, %v82
    %v84 = vsub.f32 1.0, %v83
    %v85 = vmul.f32 %v82, %v84
    %v86 = vadd.f32 %v82, %v85
    %vm87 = vweird.f32 %v81
    %vm88 = vweird.f32 %v82
    %vm89 = vmor %vm87, %vm88
    %v90 = vsel %vm89, %v82, %v86
    %v91 = vand.u32 2147483647, %v81
    %vm92 = vcmp.eq.f32.partialorder %v91, 8.507059e+37
    %v93 = vand.u32 %v81, 2147483648
    %v94 = vor.u32 1.1754944e-38, %v93
    %v95 = vsel %vm92, %v94, %v90
    %v96 = vmul.f32 1.0, %v95
    %v97 = vmul.f32 %v96, 15.0
    %v98 = vmul.f32 %v96, 31.0
    %v99 = vadd.f32 %v76, 2.0
    %v100 = vmax.f32 %v99, 0.0
    %vm101 = vcmp.ne.f32.partialorder %v99, %v99
    %v102 = vadd.f32 %v99, 0.0
    %v103 = vand.u32 2147483647, %v99
    %v104 = vsub.f32 0.0, %v103
    %v105 = vmul.f32 %v104, 1.442695
    %v106 = vpow.pop %v105
    %v107 = vadd.f32 %v106, 1.0
    %v108 = vlog2.pop %v107
    %v109 = vmul.f32 %v108, 0.6931472
    %v110 = vmul.f32 -0.5, %v106
    %v111 = vadd.f32 %v110, 1.0
    %v112 = vmul.f32 %v111, %v106
    %v113 = vand.u32 2147483647, %v106
    %vm114 = vcmp.lt.f32.partialorder %v113, 0.0004427343
    %v115 = vsel %vm114, %v112, %v109
    %v116 = vadd.f32 %v100, %v115
    %v117 = vsel %vm101, %v102, %v116
    %v118 = vadd.f32 %v117, 1e-06
    %v119 = vmul.f32 %v118, 16.0
    %v120 = vmul.f32 %v118, 32.0
    %v121 = vmul.f32 %v119, %v119
    %v122 = vadd.f32 %v121, 1e-06
    %v123 = vrcp.pop %v122
    %v124 = vmul.f32 %v122, %v123
    %v125 = vsub.f32 1.0, %v124
    %v126 = vmul.f32 %v123, %v125
    %v127 = vadd.f32 %v123, %v126
    %vm128 = vweird.f32 %v122
    %vm129 = vweird.f32 %v123
    %vm130 = vmor %vm128, %vm129
    %v131 = vsel %vm130, %v123, %v127
    %v132 = vand.u32 2147483647, %v122
    %vm133 = vcmp.eq.f32.partialorder %v132, 8.507059e+37
    %v134 = vand.u32 %v122, 2147483648
    %v135 = vor.u32 1.1754944e-38, %v134
    %v136 = vsel %vm133, %v135, %v131
    %v137 = vmul.f32 1.0, %v136
    %v138 = vmul.f32 %v120, %v120
    %v139 = vadd.f32 %v138, 1e-06
    %v140 = vrcp.pop %v139
    %v141 = vmul.f32 %v139, %v140
    %v142 = vsub.f32 1.0, %v141
    %v143 = vmul.f32 %v140, %v142
    %v144 = vadd.f32 %v140, %v143
    %vm145 = vweird.f32 %v139
    %vm146 = vweird.f32 %v140
    %vm147 = vmor %vm145, %vm146
    %v148 = vsel %vm147, %v140, %v144
    %v149 = vand.u32 2147483647, %v139
    %vm150 = vcmp.eq.f32.partialorder %v149, 8.507059e+37
    %v151 = vand.u32 %v139, 2147483648
    %v152 = vor.u32 1.1754944e-38, %v151
    %v153 = vsel %vm150, %v152, %v148
    %v154 = vmul.f32 1.0, %v153
    %v155 = vfloor.f32 %v97
    %v156 = vceil.f32 %v97
    %v157 = vfloor.f32 %v98
    %v158 = vceil.f32 %v98
    %v159 = vlaneseq
    %v160 = vshrl.u32 %v159, 7
    %vm161 = vcmp.lt.s32.totalorder %v160, 2
    %vm162 = vcmp.lt.s32.totalorder %v160, 0
    %v163 = vsub.s32 0, %v160
    %v164 = vsel %vm162, %v163, %v160
    %v165 = vshrl.u32 %v164, 1
    %v166 = vand.u32 %v164, 1
    %v167 = vsub.s32 0, %v166
    %v168 = vsel %vm162, %v167, %v166
    %vm169 = vcmp.ne.s32.totalorder %v168, 0
    %vm170 = vcmp.lt.s32.totalorder %v168, 0
    %vm171 = vmand %vm170, %vm169
    %v172 = vadd.s32 %v168, 2
    %v173 = vsel %vm171, %v172, %v168
    %vm174 = vcmp.eq.s32.totalorder %v173, 0
    %v176 = vrot.slane %v155, 1
    %v177 = vrot.slane %v155, 2
    %v178 = vrot.slane %v155, 3
    %v179 = vrot.slane %v155, 4
    %v180 = vrot.slane %v155, 5
    %v181 = vrot.slane %v155, 6
    %v182 = vrot.slane %v155, 7
    %v184 = vrot.slane %v156, 1
    %v185 = vrot.slane %v156, 2
    %v186 = vrot.slane %v156, 3
    %v187 = vrot.slane %v156, 4
    %v188 = vrot.slane %v156, 5
    %v189 = vrot.slane %v156, 6
    %v190 = vrot.slane %v156, 7
    %v191 = vsel %vm161, 1, 0
    %vm192 = vcmp.eq.s32.totalorder %v191, 1
    %v193 = vperm.slane %v155, 0
    %v194 = vperm.slane %v176, 0
    %v195 = vperm.slane %v177, 0
    %v196 = vperm.slane %v178, 0
    %v197 = vperm.slane %v179, 0
    %v198 = vperm.slane %v180, 0
    %v199 = vperm.slane %v181, 0
    %v200 = vperm.slane %v182, 0
    %v209 = vperm.slane %v156, 0
    %v210 = vperm.slane %v184, 0
    %v211 = vperm.slane %v185, 0
    %v212 = vperm.slane %v186, 0
    %v213 = vperm.slane %v187, 0
    %v214 = vperm.slane %v188, 0
    %v215 = vperm.slane %v189, 0
    %v216 = vperm.slane %v190, 0
    %v225 = vsel %vm192, %v193, %v209
    %v226 = vsel %vm192, %v194, %v210
    %v227 = vsel %vm192, %v195, %v211
    %v228 = vsel %vm192, %v196, %v212
    %v229 = vsel %vm192, %v197, %v213
    %v230 = vsel %vm192, %v198, %v214
    %v231 = vsel %vm192, %v199, %v215
    %v232 = vsel %vm192, %v200, %v216
    %v234 = vrot.slane %v157, 1
    %v235 = vrot.slane %v157, 2
    %v236 = vrot.slane %v157, 3
    %v237 = vrot.slane %v157, 4
    %v238 = vrot.slane %v157, 5
    %v239 = vrot.slane %v157, 6
    %v240 = vrot.slane %v157, 7
    %v242 = vrot.slane %v158, 1
    %v243 = vrot.slane %v158, 2
    %v244 = vrot.slane %v158, 3
    %v245 = vrot.slane %v158, 4
    %v246 = vrot.slane %v158, 5
    %v247 = vrot.slane %v158, 6
    %v248 = vrot.slane %v158, 7
    %v249 = vsel %vm174, 1, 0
    %vm250 = vcmp.eq.s32.totalorder %v249, 1
    %v251 = vperm.slane %v157, 0
    %v252 = vperm.slane %v234, 0
    %v253 = vperm.slane %v235, 0
    %v254 = vperm.slane %v236, 0
    %v255 = vperm.slane %v237, 0
    %v256 = vperm.slane %v238, 0
    %v257 = vperm.slane %v239, 0
    %v258 = vperm.slane %v240, 0
    %v267 = vperm.slane %v158, 0
    %v268 = vperm.slane %v242, 0
    %v269 = vperm.slane %v243, 0
    %v270 = vperm.slane %v244, 0
    %v271 = vperm.slane %v245, 0
    %v272 = vperm.slane %v246, 0
    %v273 = vperm.slane %v247, 0
    %v274 = vperm.slane %v248, 0
    %v283 = vsel %vm250, %v251, %v267
    %v284 = vsel %vm250, %v252, %v268
    %v285 = vsel %vm250, %v253, %v269
    %v286 = vsel %vm250, %v254, %v270
    %v287 = vsel %vm250, %v255, %v271
    %v288 = vsel %vm250, %v256, %v272
    %v289 = vsel %vm250, %v257, %v273
    %v290 = vsel %vm250, %v258, %v274
    %v292 = vrot.slane %v97, 1
    %v293 = vrot.slane %v97, 2
    %v294 = vrot.slane %v97, 3
    %v295 = vrot.slane %v97, 4
    %v296 = vrot.slane %v97, 5
    %v297 = vrot.slane %v97, 6
    %v298 = vrot.slane %v97, 7
    %v299 = vperm.slane %v97, 0
    %v300 = vperm.slane %v292, 0
    %v301 = vperm.slane %v293, 0
    %v302 = vperm.slane %v294, 0
    %v303 = vperm.slane %v295, 0
    %v304 = vperm.slane %v296, 0
    %v305 = vperm.slane %v297, 0
    %v306 = vperm.slane %v298, 0
    %v315 = vsub.f32 %v225, %v299
    %v316 = vsub.f32 %v226, %v300
    %v317 = vsub.f32 %v227, %v301
    %v318 = vsub.f32 %v228, %v302
    %v319 = vsub.f32 %v229, %v303
    %v320 = vsub.f32 %v230, %v304
    %v321 = vsub.f32 %v231, %v305
    %v322 = vsub.f32 %v232, %v306
    %v324 = vrot.slane %v98, 1
    %v325 = vrot.slane %v98, 2
    %v326 = vrot.slane %v98, 3
    %v327 = vrot.slane %v98, 4
    %v328 = vrot.slane %v98, 5
    %v329 = vrot.slane %v98, 6
    %v330 = vrot.slane %v98, 7
    %v331 = vperm.slane %v98, 0
    %v332 = vperm.slane %v324, 0
    %v333 = vperm.slane %v325, 0
    %v334 = vperm.slane %v326, 0
    %v335 = vperm.slane %v327, 0
    %v336 = vperm.slane %v328, 0
    %v337 = vperm.slane %v329, 0
    %v338 = vperm.slane %v330, 0
    %v347 = vsub.f32 %v283, %v331
    %v348 = vsub.f32 %v284, %v332
    %v349 = vsub.f32 %v285, %v333
    %v350 = vsub.f32 %v286, %v334
    %v351 = vsub.f32 %v287, %v335
    %v352 = vsub.f32 %v288, %v336
    %v353 = vsub.f32 %v289, %v337
    %v354 = vsub.f32 %v290, %v338
    %v355 = vmul.f32 %v315, %v315
    %v356 = vmul.f32 %v316, %v316
    %v357 = vmul.f32 %v317, %v317
    %v358 = vmul.f32 %v318, %v318
    %v359 = vmul.f32 %v319, %v319
    %v360 = vmul.f32 %v320, %v320
    %v361 = vmul.f32 %v321, %v321
    %v362 = vmul.f32 %v322, %v322
    %v364 = vrot.slane %v137, 1
    %v365 = vrot.slane %v137, 2
    %v366 = vrot.slane %v137, 3
    %v367 = vrot.slane %v137, 4
    %v368 = vrot.slane %v137, 5
    %v369 = vrot.slane %v137, 6
    %v370 = vrot.slane %v137, 7
    %v371 = vperm.slane %v137, 0
    %v372 = vperm.slane %v364, 0
    %v373 = vperm.slane %v365, 0
    %v374 = vperm.slane %v366, 0
    %v375 = vperm.slane %v367, 0
    %v376 = vperm.slane %v368, 0
    %v377 = vperm.slane %v369, 0
    %v378 = vperm.slane %v370, 0
    %379 = vrot.lane.b32.xlu0 %v371, 112
    %v380 = vpop.permute.xlu0 %379
    %381 = vrot.lane.b32.xlu0 %v372, 112
    %v382 = vpop.permute.xlu0 %381
    %383 = vrot.lane.b32.xlu0 %v373, 112
    %v384 = vpop.permute.xlu0 %383
    %385 = vrot.lane.b32.xlu0 %v374, 112
    %v386 = vpop.permute.xlu0 %385
    %387 = vrot.lane.b32.xlu0 %v375, 112
    %v388 = vpop.permute.xlu0 %387
    %389 = vrot.lane.b32.xlu0 %v376, 112
    %v390 = vpop.permute.xlu0 %389
    %391 = vrot.lane.b32.xlu0 %v377, 112
    %v392 = vpop.permute.xlu0 %391
    %393 = vrot.lane.b32.xlu0 %v378, 112
    %v394 = vpop.permute.xlu0 %393
    %v403 = vmul.f32 %v355, %v380
    %v404 = vmul.f32 %v356, %v382
    %v405 = vmul.f32 %v357, %v384
    %v406 = vmul.f32 %v358, %v386
    %v407 = vmul.f32 %v359, %v388
    %v408 = vmul.f32 %v360, %v390
    %v409 = vmul.f32 %v361, %v392
    %v410 = vmul.f32 %v362, %v394
    %v411 = vmul.f32 %v347, %v347
    %v412 = vmul.f32 %v348, %v348
    %v413 = vmul.f32 %v349, %v349
    %v414 = vmul.f32 %v350, %v350
    %v415 = vmul.f32 %v351, %v351
    %v416 = vmul.f32 %v352, %v352
    %v417 = vmul.f32 %v353, %v353
    %v418 = vmul.f32 %v354, %v354
    %v420 = vrot.slane %v154, 1
    %v421 = vrot.slane %v154, 2
    %v422 = vrot.slane %v154, 3
    %v423 = vrot.slane %v154, 4
    %v424 = vrot.slane %v154, 5
    %v425 = vrot.slane %v154, 6
    %v426 = vrot.slane %v154, 7
    %v427 = vperm.slane %v154, 0
    %v428 = vperm.slane %v420, 0
    %v429 = vperm.slane %v421, 0
    %v430 = vperm.slane %v422, 0
    %v431 = vperm.slane %v423, 0
    %v432 = vperm.slane %v424, 0
    %v433 = vperm.slane %v425, 0
    %v434 = vperm.slane %v426, 0
    %435 = vrot.lane.b32.xlu0 %v427, 120
    %v436 = vpop.permute.xlu0 %435
    %437 = vrot.lane.b32.xlu0 %v428, 120
    %v438 = vpop.permute.xlu0 %437
    %439 = vrot.lane.b32.xlu0 %v429, 120
    %v440 = vpop.permute.xlu0 %439
    %441 = vrot.lane.b32.xlu0 %v430, 120
    %v442 = vpop.permute.xlu0 %441
    %443 = vrot.lane.b32.xlu0 %v431, 120
    %v444 = vpop.permute.xlu0 %443
    %445 = vrot.lane.b32.xlu0 %v432, 120
    %v446 = vpop.permute.xlu0 %445
    %447 = vrot.lane.b32.xlu0 %v433, 120
    %v448 = vpop.permute.xlu0 %447
    %449 = vrot.lane.b32.xlu0 %v434, 120
    %v450 = vpop.permute.xlu0 %449
    %v459 = vmul.f32 %v411, %v436
    %v460 = vmul.f32 %v412, %v438
    %v461 = vmul.f32 %v413, %v440
    %v462 = vmul.f32 %v414, %v442
    %v463 = vmul.f32 %v415, %v444
    %v464 = vmul.f32 %v416, %v446
    %v465 = vmul.f32 %v417, %v448
    %v466 = vmul.f32 %v418, %v450
    %475 = vrot.lane.b32.xlu0 %v459, 120
    %v476 = vpop.permute.xlu0 %475
    %477 = vrot.lane.b32.xlu0 %v460, 120
    %v478 = vpop.permute.xlu0 %477
    %479 = vrot.lane.b32.xlu0 %v461, 120
    %v480 = vpop.permute.xlu0 %479
    %481 = vrot.lane.b32.xlu0 %v462, 120
    %v482 = vpop.permute.xlu0 %481
    %483 = vrot.lane.b32.xlu0 %v463, 120
    %v484 = vpop.permute.xlu0 %483
    %485 = vrot.lane.b32.xlu0 %v464, 120
    %v486 = vpop.permute.xlu0 %485
    %487 = vrot.lane.b32.xlu0 %v465, 120
    %v488 = vpop.permute.xlu0 %487
    %489 = vrot.lane.b32.xlu0 %v466, 120
    %v490 = vpop.permute.xlu0 %489
    %v499 = vadd.f32 %v403, %v476
    %v500 = vadd.f32 %v404, %v478
    %v501 = vadd.f32 %v405, %v480
    %v502 = vadd.f32 %v406, %v482
    %v503 = vadd.f32 %v407, %v484
    %v504 = vadd.f32 %v408, %v486
    %v505 = vadd.f32 %v409, %v488
    %v506 = vadd.f32 %v410, %v490
    %v507 = vmul.f32 %v499, -0.5
    %v508 = vmul.f32 %v500, -0.5
    %v509 = vmul.f32 %v501, -0.5
    %v510 = vmul.f32 %v502, -0.5
    %v511 = vmul.f32 %v503, -0.5
    %v512 = vmul.f32 %v504, -0.5
    %v513 = vmul.f32 %v505, -0.5
    %v514 = vmul.f32 %v506, -0.5
    %v515 = vmul.f32 %v507, 1.442695
    %v516 = vpow.pop %v515
    %v517 = vmul.f32 %v508, 1.442695
    %v518 = vpow.pop %v517
    %v519 = vmul.f32 %v509, 1.442695
    %v520 = vpow.pop %v519
    %v521 = vmul.f32 %v510, 1.442695
    %v522 = vpow.pop %v521
    %v523 = vmul.f32 %v511, 1.442695
    %v524 = vpow.pop %v523
    %v525 = vmul.f32 %v512, 1.442695
    %v526 = vpow.pop %v525
    %v527 = vmul.f32 %v513, 1.442695
    %v528 = vpow.pop %v527
    %v529 = vmul.f32 %v514, 1.442695
    %v530 = vpow.pop %v529
    %vm531 = vcmask 191616
    %v532 = vsel %vm531, %v516, 0.0
    %v533 = vrot.slane %v532, 4
    %v534 = vadd.f32 %v532, %v533
    %v535 = vrot.slane %v534, 2
    %v536 = vadd.f32 %v534, %v535
    %v537 = vrot.slane %v536, 1
    %v538 = vadd.f32 %v536, %v537
    %v539 = vsel %vm531, %v518, 0.0
    %v540 = vrot.slane %v539, 4
    %v541 = vadd.f32 %v539, %v540
    %v542 = vrot.slane %v541, 2
    %v543 = vadd.f32 %v541, %v542
    %v544 = vrot.slane %v543, 1
    %v545 = vadd.f32 %v543, %v544
    %v546 = vsel %vm531, %v520, 0.0
    %v547 = vrot.slane %v546, 4
    %v548 = vadd.f32 %v546, %v547
    %v549 = vrot.slane %v548, 2
    %v550 = vadd.f32 %v548, %v549
    %v551 = vrot.slane %v550, 1
    %v552 = vadd.f32 %v550, %v551
    %v553 = vsel %vm531, %v522, 0.0
    %v554 = vrot.slane %v553, 4
    %v555 = vadd.f32 %v553, %v554
    %v556 = vrot.slane %v555, 2
    %v557 = vadd.f32 %v555, %v556
    %v558 = vrot.slane %v557, 1
    %v559 = vadd.f32 %v557, %v558
    %v560 = vsel %vm531, %v524, 0.0
    %v561 = vrot.slane %v560, 4
    %v562 = vadd.f32 %v560, %v561
    %v563 = vrot.slane %v562, 2
    %v564 = vadd.f32 %v562, %v563
    %v565 = vrot.slane %v564, 1
    %v566 = vadd.f32 %v564, %v565
    %v567 = vsel %vm531, %v526, 0.0
    %v568 = vrot.slane %v567, 4
    %v569 = vadd.f32 %v567, %v568
    %v570 = vrot.slane %v569, 2
    %v571 = vadd.f32 %v569, %v570
    %v572 = vrot.slane %v571, 1
    %v573 = vadd.f32 %v571, %v572
    %v574 = vsel %vm531, %v528, 0.0
    %v575 = vrot.slane %v574, 4
    %v576 = vadd.f32 %v574, %v575
    %v577 = vrot.slane %v576, 2
    %v578 = vadd.f32 %v576, %v577
    %v579 = vrot.slane %v578, 1
    %v580 = vadd.f32 %v578, %v579
    %v581 = vsel %vm531, %v530, 0.0
    %v582 = vrot.slane %v581, 4
    %v583 = vadd.f32 %v581, %v582
    %v584 = vrot.slane %v583, 2
    %v585 = vadd.f32 %v583, %v584
    %v586 = vrot.slane %v585, 1
    %v587 = vadd.f32 %v585, %v586
    %v588 = vadd.f32 %v538, 4e-06
    %v589 = vadd.f32 %v545, 4e-06
    %v590 = vadd.f32 %v552, 4e-06
    %v591 = vadd.f32 %v559, 4e-06
    %v592 = vadd.f32 %v566, 4e-06
    %v593 = vadd.f32 %v573, 4e-06
    %v594 = vadd.f32 %v580, 4e-06
    %v595 = vadd.f32 %v587, 4e-06
    %v597 = vrot.slane %v76, 1
    %v598 = vrot.slane %v76, 2
    %v599 = vrot.slane %v76, 3
    %v600 = vrot.slane %v76, 4
    %v601 = vrot.slane %v76, 5
    %v602 = vrot.slane %v76, 6
    %v603 = vrot.slane %v76, 7
    %v604 = vperm.slane %v76, 0
    %v605 = vperm.slane %v597, 0
    %v606 = vperm.slane %v598, 0
    %v607 = vperm.slane %v599, 0
    %v608 = vperm.slane %v600, 0
    %v609 = vperm.slane %v601, 0
    %v610 = vperm.slane %v602, 0
    %v611 = vperm.slane %v603, 0
    %628 = vrot.lane.b32.xlu0 %v516, 24
    %v629 = vpop.permute.xlu0 %628
    %630 = vrot.lane.b32.xlu0 %v518, 24
    %v631 = vpop.permute.xlu0 %630
    %632 = vrot.lane.b32.xlu0 %v520, 24
    %v633 = vpop.permute.xlu0 %632
    %634 = vrot.lane.b32.xlu0 %v522, 24
    %v635 = vpop.permute.xlu0 %634
    %636 = vrot.lane.b32.xlu0 %v524, 24
    %v637 = vpop.permute.xlu0 %636
    %638 = vrot.lane.b32.xlu0 %v526, 24
    %v639 = vpop.permute.xlu0 %638
    %640 = vrot.lane.b32.xlu0 %v528, 24
    %v641 = vpop.permute.xlu0 %640
    %642 = vrot.lane.b32.xlu0 %v530, 24
    %v643 = vpop.permute.xlu0 %642
    %v652 = vmul.f32 %v604, %v629
    %v653 = vmul.f32 %v605, %v631
    %v654 = vmul.f32 %v606, %v633
    %v655 = vmul.f32 %v607, %v635
    %v656 = vmul.f32 %v608, %v637
    %v657 = vmul.f32 %v609, %v639
    %v658 = vmul.f32 %v610, %v641
    %v659 = vmul.f32 %v611, %v643
    %v660 = vrcp.pop %v588
    %v661 = vrcp.pop %v589
    %v662 = vrcp.pop %v590
    %v663 = vrcp.pop %v591
    %v664 = vrcp.pop %v592
    %v665 = vrcp.pop %v593
    %v666 = vrcp.pop %v594
    %v667 = vrcp.pop %v595
    %676 = vrot.lane.b32.xlu0 %v660, 24
    %v677 = vpop.permute.xlu0 %676
    %678 = vrot.lane.b32.xlu0 %v661, 24
    %v679 = vpop.permute.xlu0 %678
    %680 = vrot.lane.b32.xlu0 %v662, 24
    %v681 = vpop.permute.xlu0 %680
    %682 = vrot.lane.b32.xlu0 %v663, 24
    %v683 = vpop.permute.xlu0 %682
    %684 = vrot.lane.b32.xlu0 %v664, 24
    %v685 = vpop.permute.xlu0 %684
    %686 = vrot.lane.b32.xlu0 %v665, 24
    %v687 = vpop.permute.xlu0 %686
    %688 = vrot.lane.b32.xlu0 %v666, 24
    %v689 = vpop.permute.xlu0 %688
    %690 = vrot.lane.b32.xlu0 %v667, 24
    %v691 = vpop.permute.xlu0 %690
    %v700 = vmul.f32 %v652, %v677
    %v701 = vmul.f32 %v653, %v679
    %v702 = vmul.f32 %v654, %v681
    %v703 = vmul.f32 %v655, %v683
    %v704 = vmul.f32 %v656, %v685
    %v705 = vmul.f32 %v657, %v687
    %v706 = vmul.f32 %v658, %v689
    %v707 = vmul.f32 %v659, %v691
    %v708 = vcvt.f32.s32.to.zero.pseudo %v283
    %v709 = vcvt.f32.s32.to.zero.pseudo %v284
    %v710 = vcvt.f32.s32.to.zero.pseudo %v285
    %v711 = vcvt.f32.s32.to.zero.pseudo %v286
    %v712 = vcvt.f32.s32.to.zero.pseudo %v287
    %v713 = vcvt.f32.s32.to.zero.pseudo %v288
    %v714 = vcvt.f32.s32.to.zero.pseudo %v289
    %v715 = vcvt.f32.s32.to.zero.pseudo %v290
    %v716 = vcvt.f32.s32.to.zero.pseudo %v225
    %v717 = vcvt.f32.s32.to.zero.pseudo %v226
    %v718 = vcvt.f32.s32.to.zero.pseudo %v227
    %v719 = vcvt.f32.s32.to.zero.pseudo %v228
    %v720 = vcvt.f32.s32.to.zero.pseudo %v229
    %v721 = vcvt.f32.s32.to.zero.pseudo %v230
    %v722 = vcvt.f32.s32.to.zero.pseudo %v231
    %v723 = vcvt.f32.s32.to.zero.pseudo %v232
    %v724 = vlaneseq
    %v725 = vand.u32 %v724, 127
    %v726 = vperm.slane %v708, 0
    %v727 = vlaneseq
    %v728 = vshrl.u32 %v727, 7
    %v729 = vadd.s32 %v728, 24
    %730 = vset.pattern.permute.xlu0 %v729
    %731 = vperm.xlu0 %730, %v726
    %v732 = vpop.permute.xlu0 %731
    %v733 = vperm.slane %v708, 1
    %v734 = vlaneseq
    %v735 = vshrl.u32 %v734, 7
    %v736 = vadd.s32 %v735, 24
    %737 = vset.pattern.permute.xlu0 %v736
    %738 = vperm.xlu0 %737, %v733
    %v739 = vpop.permute.xlu0 %738
    %v740 = vperm.slane %v708, 2
    %v741 = vlaneseq
    %v742 = vshrl.u32 %v741, 7
    %v743 = vadd.s32 %v742, 24
    %744 = vset.pattern.permute.xlu0 %v743
    %745 = vperm.xlu0 %744, %v740
    %v746 = vpop.permute.xlu0 %745
    %v747 = vperm.slane %v708, 3
    %v748 = vlaneseq
    %v749 = vshrl.u32 %v748, 7
    %v750 = vadd.s32 %v749, 24
    %751 = vset.pattern.permute.xlu0 %v750
    %752 = vperm.xlu0 %751, %v747
    %v753 = vpop.permute.xlu0 %752
    %v754 = vperm.slane %v709, 0
    %v755 = vlaneseq
    %v756 = vshrl.u32 %v755, 7
    %v757 = vadd.s32 %v756, 24
    %758 = vset.pattern.permute.xlu0 %v757
    %759 = vperm.xlu0 %758, %v754
    %v760 = vpop.permute.xlu0 %759
    %v761 = vperm.slane %v709, 1
    %v762 = vlaneseq
    %v763 = vshrl.u32 %v762, 7
    %v764 = vadd.s32 %v763, 24
    %765 = vset.pattern.permute.xlu0 %v764
    %766 = vperm.xlu0 %765, %v761
    %v767 = vpop.permute.xlu0 %766
    %v768 = vperm.slane %v709, 2
    %v769 = vlaneseq
    %v770 = vshrl.u32 %v769, 7
    %v771 = vadd.s32 %v770, 24
    %772 = vset.pattern.permute.xlu0 %v771
    %773 = vperm.xlu0 %772, %v768
    %v774 = vpop.permute.xlu0 %773
    %v775 = vperm.slane %v709, 3
    %v776 = vlaneseq
    %v777 = vshrl.u32 %v776, 7
    %v778 = vadd.s32 %v777, 24
    %779 = vset.pattern.permute.xlu0 %v778
    %780 = vperm.xlu0 %779, %v775
    %v781 = vpop.permute.xlu0 %780
    %v782 = vperm.slane %v710, 0
    %v783 = vlaneseq
    %v784 = vshrl.u32 %v783, 7
    %v785 = vadd.s32 %v784, 24
    %786 = vset.pattern.permute.xlu0 %v785
    %787 = vperm.xlu0 %786, %v782
    %v788 = vpop.permute.xlu0 %787
    %v789 = vperm.slane %v710, 1
    %v790 = vlaneseq
    %v791 = vshrl.u32 %v790, 7
    %v792 = vadd.s32 %v791, 24
    %793 = vset.pattern.permute.xlu0 %v792
    %794 = vperm.xlu0 %793, %v789
    %v795 = vpop.permute.xlu0 %794
    %v796 = vperm.slane %v710, 2
    %v797 = vlaneseq
    %v798 = vshrl.u32 %v797, 7
    %v799 = vadd.s32 %v798, 24
    %800 = vset.pattern.permute.xlu0 %v799
    %801 = vperm.xlu0 %800, %v796
    %v802 = vpop.permute.xlu0 %801
    %v803 = vperm.slane %v710, 3
    %v804 = vlaneseq
    %v805 = vshrl.u32 %v804, 7
    %v806 = vadd.s32 %v805, 24
    %807 = vset.pattern.permute.xlu0 %v806
    %808 = vperm.xlu0 %807, %v803
    %v809 = vpop.permute.xlu0 %808
    %v810 = vperm.slane %v711, 0
    %v811 = vlaneseq
    %v812 = vshrl.u32 %v811, 7
    %v813 = vadd.s32 %v812, 24
    %814 = vset.pattern.permute.xlu0 %v813
    %815 = vperm.xlu0 %814, %v810
    %v816 = vpop.permute.xlu0 %815
    %v817 = vperm.slane %v711, 1
    %v818 = vlaneseq
    %v819 = vshrl.u32 %v818, 7
    %v820 = vadd.s32 %v819, 24
    %821 = vset.pattern.permute.xlu0 %v820
    %822 = vperm.xlu0 %821, %v817
    %v823 = vpop.permute.xlu0 %822
    %v824 = vperm.slane %v711, 2
    %v825 = vlaneseq
    %v826 = vshrl.u32 %v825, 7
    %v827 = vadd.s32 %v826, 24
    %828 = vset.pattern.permute.xlu0 %v827
    %829 = vperm.xlu0 %828, %v824
    %v830 = vpop.permute.xlu0 %829
    %v831 = vperm.slane %v711, 3
    %v832 = vlaneseq
    %v833 = vshrl.u32 %v832, 7
    %v834 = vadd.s32 %v833, 24
    %835 = vset.pattern.permute.xlu0 %v834
    %836 = vperm.xlu0 %835, %v831
    %v837 = vpop.permute.xlu0 %836
    %v838 = vperm.slane %v712, 0
    %v839 = vlaneseq
    %v840 = vshrl.u32 %v839, 7
    %v841 = vadd.s32 %v840, 24
    %842 = vset.pattern.permute.xlu0 %v841
    %843 = vperm.xlu0 %842, %v838
    %v844 = vpop.permute.xlu0 %843
    %v845 = vperm.slane %v712, 1
    %v846 = vlaneseq
    %v847 = vshrl.u32 %v846, 7
    %v848 = vadd.s32 %v847, 24
    %849 = vset.pattern.permute.xlu0 %v848
    %850 = vperm.xlu0 %849, %v845
    %v851 = vpop.permute.xlu0 %850
    %v852 = vperm.slane %v712, 2
    %v853 = vlaneseq
    %v854 = vshrl.u32 %v853, 7
    %v855 = vadd.s32 %v854, 24
    %856 = vset.pattern.permute.xlu0 %v855
    %857 = vperm.xlu0 %856, %v852
    %v858 = vpop.permute.xlu0 %857
    %v859 = vperm.slane %v712, 3
    %v860 = vlaneseq
    %v861 = vshrl.u32 %v860, 7
    %v862 = vadd.s32 %v861, 24
    %863 = vset.pattern.permute.xlu0 %v862
    %864 = vperm.xlu0 %863, %v859
    %v865 = vpop.permute.xlu0 %864
    %v866 = vperm.slane %v713, 0
    %v867 = vlaneseq
    %v868 = vshrl.u32 %v867, 7
    %v869 = vadd.s32 %v868, 24
    %870 = vset.pattern.permute.xlu0 %v869
    %871 = vperm.xlu0 %870, %v866
    %v872 = vpop.permute.xlu0 %871
    %v873 = vperm.slane %v713, 1
    %v874 = vlaneseq
    %v875 = vshrl.u32 %v874, 7
    %v876 = vadd.s32 %v875, 24
    %877 = vset.pattern.permute.xlu0 %v876
    %878 = vperm.xlu0 %877, %v873
    %v879 = vpop.permute.xlu0 %878
    %v880 = vperm.slane %v713, 2
    %v881 = vlaneseq
    %v882 = vshrl.u32 %v881, 7
    %v883 = vadd.s32 %v882, 24
    %884 = vset.pattern.permute.xlu0 %v883
    %885 = vperm.xlu0 %884, %v880
    %v886 = vpop.permute.xlu0 %885
    %v887 = vperm.slane %v713, 3
    %v888 = vlaneseq
    %v889 = vshrl.u32 %v888, 7
    %v890 = vadd.s32 %v889, 24
    %891 = vset.pattern.permute.xlu0 %v890
    %892 = vperm.xlu0 %891, %v887
    %v893 = vpop.permute.xlu0 %892
    %v894 = vperm.slane %v714, 0
    %v895 = vlaneseq
    %v896 = vshrl.u32 %v895, 7
    %v897 = vadd.s32 %v896, 24
    %898 = vset.pattern.permute.xlu0 %v897
    %899 = vperm.xlu0 %898, %v894
    %v900 = vpop.permute.xlu0 %899
    %v901 = vperm.slane %v714, 1
    %v902 = vlaneseq
    %v903 = vshrl.u32 %v902, 7
    %v904 = vadd.s32 %v903, 24
    %905 = vset.pattern.permute.xlu0 %v904
    %906 = vperm.xlu0 %905, %v901
    %v907 = vpop.permute.xlu0 %906
    %v908 = vperm.slane %v714, 2
    %v909 = vlaneseq
    %v910 = vshrl.u32 %v909, 7
    %v911 = vadd.s32 %v910, 24
    %912 = vset.pattern.permute.xlu0 %v911
    %913 = vperm.xlu0 %912, %v908
    %v914 = vpop.permute.xlu0 %913
    %v915 = vperm.slane %v714, 3
    %v916 = vlaneseq
    %v917 = vshrl.u32 %v916, 7
    %v918 = vadd.s32 %v917, 24
    %919 = vset.pattern.permute.xlu0 %v918
    %920 = vperm.xlu0 %919, %v915
    %v921 = vpop.permute.xlu0 %920
    %v922 = vperm.slane %v715, 0
    %v923 = vlaneseq
    %v924 = vshrl.u32 %v923, 7
    %v925 = vadd.s32 %v924, 24
    %926 = vset.pattern.permute.xlu0 %v925
    %927 = vperm.xlu0 %926, %v922
    %v928 = vpop.permute.xlu0 %927
    %v929 = vperm.slane %v715, 1
    %v930 = vlaneseq
    %v931 = vshrl.u32 %v930, 7
    %v932 = vadd.s32 %v931, 24
    %933 = vset.pattern.permute.xlu0 %v932
    %934 = vperm.xlu0 %933, %v929
    %v935 = vpop.permute.xlu0 %934
    %v936 = vperm.slane %v715, 2
    %v937 = vlaneseq
    %v938 = vshrl.u32 %v937, 7
    %v939 = vadd.s32 %v938, 24
    %940 = vset.pattern.permute.xlu0 %v939
    %941 = vperm.xlu0 %940, %v936
    %v942 = vpop.permute.xlu0 %941
    %v943 = vperm.slane %v715, 3
    %v944 = vlaneseq
    %v945 = vshrl.u32 %v944, 7
    %v946 = vadd.s32 %v945, 24
    %947 = vset.pattern.permute.xlu0 %v946
    %948 = vperm.xlu0 %947, %v943
    %v949 = vpop.permute.xlu0 %948
    %vm950 = vcmp.eq.s32.totalorder %v732, %v725
    %vm951 = vcmp.eq.s32.totalorder %v739, %v725
    %vm952 = vcmp.eq.s32.totalorder %v746, %v725
    %vm953 = vcmp.eq.s32.totalorder %v753, %v725
    %vm954 = vcmp.eq.s32.totalorder %v760, %v725
    %vm955 = vcmp.eq.s32.totalorder %v767, %v725
    %vm956 = vcmp.eq.s32.totalorder %v774, %v725
    %vm957 = vcmp.eq.s32.totalorder %v781, %v725
    %vm958 = vcmp.eq.s32.totalorder %v788, %v725
    %vm959 = vcmp.eq.s32.totalorder %v795, %v725
    %vm960 = vcmp.eq.s32.totalorder %v802, %v725
    %vm961 = vcmp.eq.s32.totalorder %v809, %v725
    %vm962 = vcmp.eq.s32.totalorder %v816, %v725
    %vm963 = vcmp.eq.s32.totalorder %v823, %v725
    %vm964 = vcmp.eq.s32.totalorder %v830, %v725
    %vm965 = vcmp.eq.s32.totalorder %v837, %v725
    %vm966 = vcmp.eq.s32.totalorder %v844, %v725
    %vm967 = vcmp.eq.s32.totalorder %v851, %v725
    %vm968 = vcmp.eq.s32.totalorder %v858, %v725
    %vm969 = vcmp.eq.s32.totalorder %v865, %v725
    %vm970 = vcmp.eq.s32.totalorder %v872, %v725
    %vm971 = vcmp.eq.s32.totalorder %v879, %v725
    %vm972 = vcmp.eq.s32.totalorder %v886, %v725
    %vm973 = vcmp.eq.s32.totalorder %v893, %v725
    %vm974 = vcmp.eq.s32.totalorder %v900, %v725
    %vm975 = vcmp.eq.s32.totalorder %v907, %v725
    %vm976 = vcmp.eq.s32.totalorder %v914, %v725
    %vm977 = vcmp.eq.s32.totalorder %v921, %v725
    %vm978 = vcmp.eq.s32.totalorder %v928, %v725
    %vm979 = vcmp.eq.s32.totalorder %v935, %v725
    %vm980 = vcmp.eq.s32.totalorder %v942, %v725
    %vm981 = vcmp.eq.s32.totalorder %v949, %v725
    %v982 = vrot.slane %v45, 1
    %v983 = vrot.slane %v45, 2
    %v984 = vrot.slane %v45, 3
    %v985 = vrot.slane %v45, 4
    %v986 = vrot.slane %v45, 5
    %v987 = vrot.slane %v45, 6
    %v988 = vrot.slane %v45, 7
    %v989 = vperm.slane %v45, 0
    %v990 = vperm.slane %v982, 0
    %v991 = vperm.slane %v983, 0
    %v992 = vperm.slane %v984, 0
    %v993 = vperm.slane %v985, 0
    %v994 = vperm.slane %v986, 0
    %v995 = vperm.slane %v987, 0
    %v996 = vperm.slane %v988, 0
    %v1005 = vsel %vm950, %v989, 0.0
    %v1006 = vsel %vm951, %v989, 0.0
    %v1007 = vsel %vm952, %v989, 0.0
    %v1008 = vsel %vm953, %v989, 0.0
    %v1009 = vsel %vm954, %v990, 0.0
    %v1010 = vsel %vm955, %v990, 0.0
    %v1011 = vsel %vm956, %v990, 0.0
    %v1012 = vsel %vm957, %v990, 0.0
    %v1013 = vsel %vm958, %v991, 0.0
    %v1014 = vsel %vm959, %v991, 0.0
    %v1015 = vsel %vm960, %v991, 0.0
    %v1016 = vsel %vm961, %v991, 0.0
    %v1017 = vsel %vm962, %v992, 0.0
    %v1018 = vsel %vm963, %v992, 0.0
    %v1019 = vsel %vm964, %v992, 0.0
    %v1020 = vsel %vm965, %v992, 0.0
    %v1021 = vsel %vm966, %v993, 0.0
    %v1022 = vsel %vm967, %v993, 0.0
    %v1023 = vsel %vm968, %v993, 0.0
    %v1024 = vsel %vm969, %v993, 0.0
    %v1025 = vsel %vm970, %v994, 0.0
    %v1026 = vsel %vm971, %v994, 0.0
    %v1027 = vsel %vm972, %v994, 0.0
    %v1028 = vsel %vm973, %v994, 0.0
    %v1029 = vsel %vm974, %v995, 0.0
    %v1030 = vsel %vm975, %v995, 0.0
    %v1031 = vsel %vm976, %v995, 0.0
    %v1032 = vsel %vm977, %v995, 0.0
    %v1033 = vsel %vm978, %v996, 0.0
    %v1034 = vsel %vm979, %v996, 0.0
    %v1035 = vsel %vm980, %v996, 0.0
    %v1036 = vsel %vm981, %v996, 0.0
    %v1037 = vsel %vm54, %v1005, 0.0
    %1038 = vadd.xlane.f32.xlu0 %v1037
    %v1039 = vpop.xlane.xlu0 %1038
    %v1040 = vsel %vm54, %v1006, 0.0
    %1041 = vadd.xlane.f32.xlu0 %v1040
    %v1042 = vpop.xlane.xlu0 %1041
    %v1043 = vsel %vm54, %v1007, 0.0
    %1044 = vadd.xlane.f32.xlu0 %v1043
    %v1045 = vpop.xlane.xlu0 %1044
    %v1046 = vsel %vm54, %v1008, 0.0
    %1047 = vadd.xlane.f32.xlu0 %v1046
    %v1048 = vpop.xlane.xlu0 %1047
    %v1049 = vsel %vm54, %v1009, 0.0
    %1050 = vadd.xlane.f32.xlu0 %v1049
    %v1051 = vpop.xlane.xlu0 %1050
    %v1052 = vsel %vm54, %v1010, 0.0
    %1053 = vadd.xlane.f32.xlu0 %v1052
    %v1054 = vpop.xlane.xlu0 %1053
    %v1055 = vsel %vm54, %v1011, 0.0
    %1056 = vadd.xlane.f32.xlu0 %v1055
    %v1057 = vpop.xlane.xlu0 %1056
    %v1058 = vsel %vm54, %v1012, 0.0
    %1059 = vadd.xlane.f32.xlu0 %v1058
    %v1060 = vpop.xlane.xlu0 %1059
    %v1061 = vsel %vm54, %v1013, 0.0
    %1062 = vadd.xlane.f32.xlu0 %v1061
    %v1063 = vpop.xlane.xlu0 %1062
    %v1064 = vsel %vm54, %v1014, 0.0
    %1065 = vadd.xlane.f32.xlu0 %v1064
    %v1066 = vpop.xlane.xlu0 %1065
    %v1067 = vsel %vm54, %v1015, 0.0
    %1068 = vadd.xlane.f32.xlu0 %v1067
    %v1069 = vpop.xlane.xlu0 %1068
    %v1070 = vsel %vm54, %v1016, 0.0
    %1071 = vadd.xlane.f32.xlu0 %v1070
    %v1072 = vpop.xlane.xlu0 %1071
    %v1073 = vsel %vm54, %v1017, 0.0
    %1074 = vadd.xlane.f32.xlu0 %v1073
    %v1075 = vpop.xlane.xlu0 %1074
    %v1076 = vsel %vm54, %v1018, 0.0
    %1077 = vadd.xlane.f32.xlu0 %v1076
    %v1078 = vpop.xlane.xlu0 %1077
    %v1079 = vsel %vm54, %v1019, 0.0
    %1080 = vadd.xlane.f32.xlu0 %v1079
    %v1081 = vpop.xlane.xlu0 %1080
    %v1082 = vsel %vm54, %v1020, 0.0
    %1083 = vadd.xlane.f32.xlu0 %v1082
    %v1084 = vpop.xlane.xlu0 %1083
    %v1085 = vsel %vm54, %v1021, 0.0
    %1086 = vadd.xlane.f32.xlu0 %v1085
    %v1087 = vpop.xlane.xlu0 %1086
    %v1088 = vsel %vm54, %v1022, 0.0
    %1089 = vadd.xlane.f32.xlu0 %v1088
    %v1090 = vpop.xlane.xlu0 %1089
    %v1091 = vsel %vm54, %v1023, 0.0
    %1092 = vadd.xlane.f32.xlu0 %v1091
    %v1093 = vpop.xlane.xlu0 %1092
    %v1094 = vsel %vm54, %v1024, 0.0
    %1095 = vadd.xlane.f32.xlu0 %v1094
    %v1096 = vpop.xlane.xlu0 %1095
    %v1097 = vsel %vm54, %v1025, 0.0
    %1098 = vadd.xlane.f32.xlu0 %v1097
    %v1099 = vpop.xlane.xlu0 %1098
    %v1100 = vsel %vm54, %v1026, 0.0
    %1101 = vadd.xlane.f32.xlu0 %v1100
    %v1102 = vpop.xlane.xlu0 %1101
    %v1103 = vsel %vm54, %v1027, 0.0
    %1104 = vadd.xlane.f32.xlu0 %v1103
    %v1105 = vpop.xlane.xlu0 %1104
    %v1106 = vsel %vm54, %v1028, 0.0
    %1107 = vadd.xlane.f32.xlu0 %v1106
    %v1108 = vpop.xlane.xlu0 %1107
    %v1109 = vsel %vm54, %v1029, 0.0
    %1110 = vadd.xlane.f32.xlu0 %v1109
    %v1111 = vpop.xlane.xlu0 %1110
    %v1112 = vsel %vm54, %v1030, 0.0
    %1113 = vadd.xlane.f32.xlu0 %v1112
    %v1114 = vpop.xlane.xlu0 %1113
    %v1115 = vsel %vm54, %v1031, 0.0
    %1116 = vadd.xlane.f32.xlu0 %v1115
    %v1117 = vpop.xlane.xlu0 %1116
    %v1118 = vsel %vm54, %v1032, 0.0
    %1119 = vadd.xlane.f32.xlu0 %v1118
    %v1120 = vpop.xlane.xlu0 %1119
    %v1121 = vsel %vm54, %v1033, 0.0
    %1122 = vadd.xlane.f32.xlu0 %v1121
    %v1123 = vpop.xlane.xlu0 %1122
    %v1124 = vsel %vm54, %v1034, 0.0
    %1125 = vadd.xlane.f32.xlu0 %v1124
    %v1126 = vpop.xlane.xlu0 %1125
    %v1127 = vsel %vm54, %v1035, 0.0
    %1128 = vadd.xlane.f32.xlu0 %v1127
    %v1129 = vpop.xlane.xlu0 %1128
    %v1130 = vsel %vm54, %v1036, 0.0
    %1131 = vadd.xlane.f32.xlu0 %v1130
    %v1132 = vpop.xlane.xlu0 %1131
    %v1165 = vadd.s32 %v725, 4294967256
    %v1166 = vperm.slane %v1039, %v1165
    %v1167 = vperm.slane %v1042, %v1165
    %v1168 = vperm.slane %v1045, %v1165
    %v1169 = vperm.slane %v1048, %v1165
    %v1170 = vperm.slane %v1051, %v1165
    %v1171 = vperm.slane %v1054, %v1165
    %v1172 = vperm.slane %v1057, %v1165
    %v1173 = vperm.slane %v1060, %v1165
    %v1174 = vperm.slane %v1063, %v1165
    %v1175 = vperm.slane %v1066, %v1165
    %v1176 = vperm.slane %v1069, %v1165
    %v1177 = vperm.slane %v1072, %v1165
    %v1178 = vperm.slane %v1075, %v1165
    %v1179 = vperm.slane %v1078, %v1165
    %v1180 = vperm.slane %v1081, %v1165
    %v1181 = vperm.slane %v1084, %v1165
    %v1182 = vperm.slane %v1087, %v1165
    %v1183 = vperm.slane %v1090, %v1165
    %v1184 = vperm.slane %v1093, %v1165
    %v1185 = vperm.slane %v1096, %v1165
    %v1186 = vperm.slane %v1099, %v1165
    %v1187 = vperm.slane %v1102, %v1165
    %v1188 = vperm.slane %v1105, %v1165
    %v1189 = vperm.slane %v1108, %v1165
    %v1190 = vperm.slane %v1111, %v1165
    %v1191 = vperm.slane %v1114, %v1165
    %v1192 = vperm.slane %v1117, %v1165
    %v1193 = vperm.slane %v1120, %v1165
    %v1194 = vperm.slane %v1123, %v1165
    %v1195 = vperm.slane %v1126, %v1165
    %v1196 = vperm.slane %v1129, %v1165
    %v1197 = vperm.slane %v1132, %v1165
    %vm1198 = vcmask 1041409
    %v1199 = vsel %vm1198, %v1167, %v1166
    %vm1200 = vcmask 1042434
    %v1201 = vsel %vm1200, %v1168, %v1199
    %vm1202 = vcmask 1043459
    %v1203 = vsel %vm1202, %v1169, %v1201
    %v1204 = vsel %vm1198, %v1171, %v1170
    %v1205 = vsel %vm1200, %v1172, %v1204
    %v1206 = vsel %vm1202, %v1173, %v1205
    %v1207 = vsel %vm1198, %v1175, %v1174
    %v1208 = vsel %vm1200, %v1176, %v1207
    %v1209 = vsel %vm1202, %v1177, %v1208
    %v1210 = vsel %vm1198, %v1179, %v1178
    %v1211 = vsel %vm1200, %v1180, %v1210
    %v1212 = vsel %vm1202, %v1181, %v1211
    %v1213 = vsel %vm1198, %v1183, %v1182
    %v1214 = vsel %vm1200, %v1184, %v1213
    %v1215 = vsel %vm1202, %v1185, %v1214
    %v1216 = vsel %vm1198, %v1187, %v1186
    %v1217 = vsel %vm1200, %v1188, %v1216
    %v1218 = vsel %vm1202, %v1189, %v1217
    %v1219 = vsel %vm1198, %v1191, %v1190
    %v1220 = vsel %vm1200, %v1192, %v1219
    %v1221 = vsel %vm1202, %v1193, %v1220
    %v1222 = vsel %vm1198, %v1195, %v1194
    %v1223 = vsel %vm1200, %v1196, %v1222
    %v1224 = vsel %vm1202, %v1197, %v1223
    %v1233 = vmul.f32 %v700, %v1203
    %v1234 = vmul.f32 %v701, %v1206
    %v1235 = vmul.f32 %v702, %v1209
    %v1236 = vmul.f32 %v703, %v1212
    %v1237 = vmul.f32 %v704, %v1215
    %v1238 = vmul.f32 %v705, %v1218
    %v1239 = vmul.f32 %v706, %v1221
    %v1240 = vmul.f32 %v707, %v1224
    %v1241 = vperm.slane %v716, 0
    %v1242 = vlaneseq
    %v1243 = vshrl.u32 %v1242, 7
    %v1244 = vadd.s32 %v1243, 16
    %1245 = vset.pattern.permute.xlu0 %v1244
    %1246 = vperm.xlu0 %1245, %v1241
    %v1247 = vpop.permute.xlu0 %1246
    %v1248 = vperm.slane %v716, 1
    %v1249 = vlaneseq
    %v1250 = vshrl.u32 %v1249, 7
    %v1251 = vadd.s32 %v1250, 16
    %1252 = vset.pattern.permute.xlu0 %v1251
    %1253 = vperm.xlu0 %1252, %v1248
    %v1254 = vpop.permute.xlu0 %1253
    %v1255 = vperm.slane %v716, 2
    %v1256 = vlaneseq
    %v1257 = vshrl.u32 %v1256, 7
    %v1258 = vadd.s32 %v1257, 16
    %1259 = vset.pattern.permute.xlu0 %v1258
    %1260 = vperm.xlu0 %1259, %v1255
    %v1261 = vpop.permute.xlu0 %1260
    %v1262 = vperm.slane %v716, 3
    %v1263 = vlaneseq
    %v1264 = vshrl.u32 %v1263, 7
    %v1265 = vadd.s32 %v1264, 16
    %1266 = vset.pattern.permute.xlu0 %v1265
    %1267 = vperm.xlu0 %1266, %v1262
    %v1268 = vpop.permute.xlu0 %1267
    %v1269 = vperm.slane %v717, 0
    %v1270 = vlaneseq
    %v1271 = vshrl.u32 %v1270, 7
    %v1272 = vadd.s32 %v1271, 16
    %1273 = vset.pattern.permute.xlu0 %v1272
    %1274 = vperm.xlu0 %1273, %v1269
    %v1275 = vpop.permute.xlu0 %1274
    %v1276 = vperm.slane %v717, 1
    %v1277 = vlaneseq
    %v1278 = vshrl.u32 %v1277, 7
    %v1279 = vadd.s32 %v1278, 16
    %1280 = vset.pattern.permute.xlu0 %v1279
    %1281 = vperm.xlu0 %1280, %v1276
    %v1282 = vpop.permute.xlu0 %1281
    %v1283 = vperm.slane %v717, 2
    %v1284 = vlaneseq
    %v1285 = vshrl.u32 %v1284, 7
    %v1286 = vadd.s32 %v1285, 16
    %1287 = vset.pattern.permute.xlu0 %v1286
    %1288 = vperm.xlu0 %1287, %v1283
    %v1289 = vpop.permute.xlu0 %1288
    %v1290 = vperm.slane %v717, 3
    %v1291 = vlaneseq
    %v1292 = vshrl.u32 %v1291, 7
    %v1293 = vadd.s32 %v1292, 16
    %1294 = vset.pattern.permute.xlu0 %v1293
    %1295 = vperm.xlu0 %1294, %v1290
    %v1296 = vpop.permute.xlu0 %1295
    %v1297 = vperm.slane %v718, 0
    %v1298 = vlaneseq
    %v1299 = vshrl.u32 %v1298, 7
    %v1300 = vadd.s32 %v1299, 16
    %1301 = vset.pattern.permute.xlu0 %v1300
    %1302 = vperm.xlu0 %1301, %v1297
    %v1303 = vpop.permute.xlu0 %1302
    %v1304 = vperm.slane %v718, 1
    %v1305 = vlaneseq
    %v1306 = vshrl.u32 %v1305, 7
    %v1307 = vadd.s32 %v1306, 16
    %1308 = vset.pattern.permute.xlu0 %v1307
    %1309 = vperm.xlu0 %1308, %v1304
    %v1310 = vpop.permute.xlu0 %1309
    %v1311 = vperm.slane %v718, 2
    %v1312 = vlaneseq
    %v1313 = vshrl.u32 %v1312, 7
    %v1314 = vadd.s32 %v1313, 16
    %1315 = vset.pattern.permute.xlu0 %v1314
    %1316 = vperm.xlu0 %1315, %v1311
    %v1317 = vpop.permute.xlu0 %1316
    %v1318 = vperm.slane %v718, 3
    %v1319 = vlaneseq
    %v1320 = vshrl.u32 %v1319, 7
    %v1321 = vadd.s32 %v1320, 16
    %1322 = vset.pattern.permute.xlu0 %v1321
    %1323 = vperm.xlu0 %1322, %v1318
    %v1324 = vpop.permute.xlu0 %1323
    %v1325 = vperm.slane %v719, 0
    %v1326 = vlaneseq
    %v1327 = vshrl.u32 %v1326, 7
    %v1328 = vadd.s32 %v1327, 16
    %1329 = vset.pattern.permute.xlu0 %v1328
    %1330 = vperm.xlu0 %1329, %v1325
    %v1331 = vpop.permute.xlu0 %1330
    %v1332 = vperm.slane %v719, 1
    %v1333 = vlaneseq
    %v1334 = vshrl.u32 %v1333, 7
    %v1335 = vadd.s32 %v1334, 16
    %1336 = vset.pattern.permute.xlu0 %v1335
    %1337 = vperm.xlu0 %1336, %v1332
    %v1338 = vpop.permute.xlu0 %1337
    %v1339 = vperm.slane %v719, 2
    %v1340 = vlaneseq
    %v1341 = vshrl.u32 %v1340, 7
    %v1342 = vadd.s32 %v1341, 16
    %1343 = vset.pattern.permute.xlu0 %v1342
    %1344 = vperm.xlu0 %1343, %v1339
    %v1345 = vpop.permute.xlu0 %1344
    %v1346 = vperm.slane %v719, 3
    %v1347 = vlaneseq
    %v1348 = vshrl.u32 %v1347, 7
    %v1349 = vadd.s32 %v1348, 16
    %1350 = vset.pattern.permute.xlu0 %v1349
    %1351 = vperm.xlu0 %1350, %v1346
    %v1352 = vpop.permute.xlu0 %1351
    %v1353 = vperm.slane %v720, 0
    %v1354 = vlaneseq
    %v1355 = vshrl.u32 %v1354, 7
    %v1356 = vadd.s32 %v1355, 16
    %1357 = vset.pattern.permute.xlu0 %v1356
    %1358 = vperm.xlu0 %1357, %v1353
    %v1359 = vpop.permute.xlu0 %1358
    %v1360 = vperm.slane %v720, 1
    %v1361 = vlaneseq
    %v1362 = vshrl.u32 %v1361, 7
    %v1363 = vadd.s32 %v1362, 16
    %1364 = vset.pattern.permute.xlu0 %v1363
    %1365 = vperm.xlu0 %1364, %v1360
    %v1366 = vpop.permute.xlu0 %1365
    %v1367 = vperm.slane %v720, 2
    %v1368 = vlaneseq
    %v1369 = vshrl.u32 %v1368, 7
    %v1370 = vadd.s32 %v1369, 16
    %1371 = vset.pattern.permute.xlu0 %v1370
    %1372 = vperm.xlu0 %1371, %v1367
    %v1373 = vpop.permute.xlu0 %1372
    %v1374 = vperm.slane %v720, 3
    %v1375 = vlaneseq
    %v1376 = vshrl.u32 %v1375, 7
    %v1377 = vadd.s32 %v1376, 16
    %1378 = vset.pattern.permute.xlu0 %v1377
    %1379 = vperm.xlu0 %1378, %v1374
    %v1380 = vpop.permute.xlu0 %1379
    %v1381 = vperm.slane %v721, 0
    %v1382 = vlaneseq
    %v1383 = vshrl.u32 %v1382, 7
    %v1384 = vadd.s32 %v1383, 16
    %1385 = vset.pattern.permute.xlu0 %v1384
    %1386 = vperm.xlu0 %1385, %v1381
    %v1387 = vpop.permute.xlu0 %1386
    %v1388 = vperm.slane %v721, 1
    %v1389 = vlaneseq
    %v1390 = vshrl.u32 %v1389, 7
    %v1391 = vadd.s32 %v1390, 16
    %1392 = vset.pattern.permute.xlu0 %v1391
    %1393 = vperm.xlu0 %1392, %v1388
    %v1394 = vpop.permute.xlu0 %1393
    %v1395 = vperm.slane %v721, 2
    %v1396 = vlaneseq
    %v1397 = vshrl.u32 %v1396, 7
    %v1398 = vadd.s32 %v1397, 16
    %1399 = vset.pattern.permute.xlu0 %v1398
    %1400 = vperm.xlu0 %1399, %v1395
    %v1401 = vpop.permute.xlu0 %1400
    %v1402 = vperm.slane %v721, 3
    %v1403 = vlaneseq
    %v1404 = vshrl.u32 %v1403, 7
    %v1405 = vadd.s32 %v1404, 16
    %1406 = vset.pattern.permute.xlu0 %v1405
    %1407 = vperm.xlu0 %1406, %v1402
    %v1408 = vpop.permute.xlu0 %1407
    %v1409 = vperm.slane %v722, 0
    %v1410 = vlaneseq
    %v1411 = vshrl.u32 %v1410, 7
    %v1412 = vadd.s32 %v1411, 16
    %1413 = vset.pattern.permute.xlu0 %v1412
    %1414 = vperm.xlu0 %1413, %v1409
    %v1415 = vpop.permute.xlu0 %1414
    %v1416 = vperm.slane %v722, 1
    %v1417 = vlaneseq
    %v1418 = vshrl.u32 %v1417, 7
    %v1419 = vadd.s32 %v1418, 16
    %1420 = vset.pattern.permute.xlu0 %v1419
    %1421 = vperm.xlu0 %1420, %v1416
    %v1422 = vpop.permute.xlu0 %1421
    %v1423 = vperm.slane %v722, 2
    %v1424 = vlaneseq
    %v1425 = vshrl.u32 %v1424, 7
    %v1426 = vadd.s32 %v1425, 16
    %1427 = vset.pattern.permute.xlu0 %v1426
    %1428 = vperm.xlu0 %1427, %v1423
    %v1429 = vpop.permute.xlu0 %1428
    %v1430 = vperm.slane %v722, 3
    %v1431 = vlaneseq
    %v1432 = vshrl.u32 %v1431, 7
    %v1433 = vadd.s32 %v1432, 16
    %1434 = vset.pattern.permute.xlu0 %v1433
    %1435 = vperm.xlu0 %1434, %v1430
    %v1436 = vpop.permute.xlu0 %1435
    %v1437 = vperm.slane %v723, 0
    %v1438 = vlaneseq
    %v1439 = vshrl.u32 %v1438, 7
    %v1440 = vadd.s32 %v1439, 16
    %1441 = vset.pattern.permute.xlu0 %v1440
    %1442 = vperm.xlu0 %1441, %v1437
    %v1443 = vpop.permute.xlu0 %1442
    %v1444 = vperm.slane %v723, 1
    %v1445 = vlaneseq
    %v1446 = vshrl.u32 %v1445, 7
    %v1447 = vadd.s32 %v1446, 16
    %1448 = vset.pattern.permute.xlu0 %v1447
    %1449 = vperm.xlu0 %1448, %v1444
    %v1450 = vpop.permute.xlu0 %1449
    %v1451 = vperm.slane %v723, 2
    %v1452 = vlaneseq
    %v1453 = vshrl.u32 %v1452, 7
    %v1454 = vadd.s32 %v1453, 16
    %1455 = vset.pattern.permute.xlu0 %v1454
    %1456 = vperm.xlu0 %1455, %v1451
    %v1457 = vpop.permute.xlu0 %1456
    %v1458 = vperm.slane %v723, 3
    %v1459 = vlaneseq
    %v1460 = vshrl.u32 %v1459, 7
    %v1461 = vadd.s32 %v1460, 16
    %1462 = vset.pattern.permute.xlu0 %v1461
    %1463 = vperm.xlu0 %1462, %v1458
    %v1464 = vpop.permute.xlu0 %1463
    %vm1465 = vcmp.eq.s32.totalorder %v1247, %v725
    %vm1466 = vcmp.eq.s32.totalorder %v1254, %v725
    %vm1467 = vcmp.eq.s32.totalorder %v1261, %v725
    %vm1468 = vcmp.eq.s32.totalorder %v1268, %v725
    %vm1469 = vcmp.eq.s32.totalorder %v1275, %v725
    %vm1470 = vcmp.eq.s32.totalorder %v1282, %v725
    %vm1471 = vcmp.eq.s32.totalorder %v1289, %v725
    %vm1472 = vcmp.eq.s32.totalorder %v1296, %v725
    %vm1473 = vcmp.eq.s32.totalorder %v1303, %v725
    %vm1474 = vcmp.eq.s32.totalorder %v1310, %v725
    %vm1475 = vcmp.eq.s32.totalorder %v1317, %v725
    %vm1476 = vcmp.eq.s32.totalorder %v1324, %v725
    %vm1477 = vcmp.eq.s32.totalorder %v1331, %v725
    %vm1478 = vcmp.eq.s32.totalorder %v1338, %v725
    %vm1479 = vcmp.eq.s32.totalorder %v1345, %v725
    %vm1480 = vcmp.eq.s32.totalorder %v1352, %v725
    %vm1481 = vcmp.eq.s32.totalorder %v1359, %v725
    %vm1482 = vcmp.eq.s32.totalorder %v1366, %v725
    %vm1483 = vcmp.eq.s32.totalorder %v1373, %v725
    %vm1484 = vcmp.eq.s32.totalorder %v1380, %v725
    %vm1485 = vcmp.eq.s32.totalorder %v1387, %v725
    %vm1486 = vcmp.eq.s32.totalorder %v1394, %v725
    %vm1487 = vcmp.eq.s32.totalorder %v1401, %v725
    %vm1488 = vcmp.eq.s32.totalorder %v1408, %v725
    %vm1489 = vcmp.eq.s32.totalorder %v1415, %v725
    %vm1490 = vcmp.eq.s32.totalorder %v1422, %v725
    %vm1491 = vcmp.eq.s32.totalorder %v1429, %v725
    %vm1492 = vcmp.eq.s32.totalorder %v1436, %v725
    %vm1493 = vcmp.eq.s32.totalorder %v1443, %v725
    %vm1494 = vcmp.eq.s32.totalorder %v1450, %v725
    %vm1495 = vcmp.eq.s32.totalorder %v1457, %v725
    %vm1496 = vcmp.eq.s32.totalorder %v1464, %v725
    %v1497 = vperm.slane %v1233, 0
    %v1498 = vlaneseq
    %v1499 = vshrl.u32 %v1498, 7
    %v1500 = vadd.s32 %v1499, 40
    %1501 = vset.pattern.permute.xlu0 %v1500
    %1502 = vperm.xlu0 %1501, %v1497
    %v1503 = vpop.permute.xlu0 %1502
    %v1504 = vperm.slane %v1233, 1
    %v1505 = vlaneseq
    %v1506 = vshrl.u32 %v1505, 7
    %v1507 = vadd.s32 %v1506, 40
    %1508 = vset.pattern.permute.xlu0 %v1507
    %1509 = vperm.xlu0 %1508, %v1504
    %v1510 = vpop.permute.xlu0 %1509
    %v1511 = vperm.slane %v1233, 2
    %v1512 = vlaneseq
    %v1513 = vshrl.u32 %v1512, 7
    %v1514 = vadd.s32 %v1513, 40
    %1515 = vset.pattern.permute.xlu0 %v1514
    %1516 = vperm.xlu0 %1515, %v1511
    %v1517 = vpop.permute.xlu0 %1516
    %v1518 = vperm.slane %v1233, 3
    %v1519 = vlaneseq
    %v1520 = vshrl.u32 %v1519, 7
    %v1521 = vadd.s32 %v1520, 40
    %1522 = vset.pattern.permute.xlu0 %v1521
    %1523 = vperm.xlu0 %1522, %v1518
    %v1524 = vpop.permute.xlu0 %1523
    %v1525 = vperm.slane %v1234, 0
    %v1526 = vlaneseq
    %v1527 = vshrl.u32 %v1526, 7
    %v1528 = vadd.s32 %v1527, 40
    %1529 = vset.pattern.permute.xlu0 %v1528
    %1530 = vperm.xlu0 %1529, %v1525
    %v1531 = vpop.permute.xlu0 %1530
    %v1532 = vperm.slane %v1234, 1
    %v1533 = vlaneseq
    %v1534 = vshrl.u32 %v1533, 7
    %v1535 = vadd.s32 %v1534, 40
    %1536 = vset.pattern.permute.xlu0 %v1535
    %1537 = vperm.xlu0 %1536, %v1532
    %v1538 = vpop.permute.xlu0 %1537
    %v1539 = vperm.slane %v1234, 2
    %v1540 = vlaneseq
    %v1541 = vshrl.u32 %v1540, 7
    %v1542 = vadd.s32 %v1541, 40
    %1543 = vset.pattern.permute.xlu0 %v1542
    %1544 = vperm.xlu0 %1543, %v1539
    %v1545 = vpop.permute.xlu0 %1544
    %v1546 = vperm.slane %v1234, 3
    %v1547 = vlaneseq
    %v1548 = vshrl.u32 %v1547, 7
    %v1549 = vadd.s32 %v1548, 40
    %1550 = vset.pattern.permute.xlu0 %v1549
    %1551 = vperm.xlu0 %1550, %v1546
    %v1552 = vpop.permute.xlu0 %1551
    %v1553 = vperm.slane %v1235, 0
    %v1554 = vlaneseq
    %v1555 = vshrl.u32 %v1554, 7
    %v1556 = vadd.s32 %v1555, 40
    %1557 = vset.pattern.permute.xlu0 %v1556
    %1558 = vperm.xlu0 %1557, %v1553
    %v1559 = vpop.permute.xlu0 %1558
    %v1560 = vperm.slane %v1235, 1
    %v1561 = vlaneseq
    %v1562 = vshrl.u32 %v1561, 7
    %v1563 = vadd.s32 %v1562, 40
    %1564 = vset.pattern.permute.xlu0 %v1563
    %1565 = vperm.xlu0 %1564, %v1560
    %v1566 = vpop.permute.xlu0 %1565
    %v1567 = vperm.slane %v1235, 2
    %v1568 = vlaneseq
    %v1569 = vshrl.u32 %v1568, 7
    %v1570 = vadd.s32 %v1569, 40
    %1571 = vset.pattern.permute.xlu0 %v1570
    %1572 = vperm.xlu0 %1571, %v1567
    %v1573 = vpop.permute.xlu0 %1572
    %v1574 = vperm.slane %v1235, 3
    %v1575 = vlaneseq
    %v1576 = vshrl.u32 %v1575, 7
    %v1577 = vadd.s32 %v1576, 40
    %1578 = vset.pattern.permute.xlu0 %v1577
    %1579 = vperm.xlu0 %1578, %v1574
    %v1580 = vpop.permute.xlu0 %1579
    %v1581 = vperm.slane %v1236, 0
    %v1582 = vlaneseq
    %v1583 = vshrl.u32 %v1582, 7
    %v1584 = vadd.s32 %v1583, 40
    %1585 = vset.pattern.permute.xlu0 %v1584
    %1586 = vperm.xlu0 %1585, %v1581
    %v1587 = vpop.permute.xlu0 %1586
    %v1588 = vperm.slane %v1236, 1
    %v1589 = vlaneseq
    %v1590 = vshrl.u32 %v1589, 7
    %v1591 = vadd.s32 %v1590, 40
    %1592 = vset.pattern.permute.xlu0 %v1591
    %1593 = vperm.xlu0 %1592, %v1588
    %v1594 = vpop.permute.xlu0 %1593
    %v1595 = vperm.slane %v1236, 2
    %v1596 = vlaneseq
    %v1597 = vshrl.u32 %v1596, 7
    %v1598 = vadd.s32 %v1597, 40
    %1599 = vset.pattern.permute.xlu0 %v1598
    %1600 = vperm.xlu0 %1599, %v1595
    %v1601 = vpop.permute.xlu0 %1600
    %v1602 = vperm.slane %v1236, 3
    %v1603 = vlaneseq
    %v1604 = vshrl.u32 %v1603, 7
    %v1605 = vadd.s32 %v1604, 40
    %1606 = vset.pattern.permute.xlu0 %v1605
    %1607 = vperm.xlu0 %1606, %v1602
    %v1608 = vpop.permute.xlu0 %1607
    %v1609 = vperm.slane %v1237, 0
    %v1610 = vlaneseq
    %v1611 = vshrl.u32 %v1610, 7
    %v1612 = vadd.s32 %v1611, 40
    %1613 = vset.pattern.permute.xlu0 %v1612
    %1614 = vperm.xlu0 %1613, %v1609
    %v1615 = vpop.permute.xlu0 %1614
    %v1616 = vperm.slane %v1237, 1
    %v1617 = vlaneseq
    %v1618 = vshrl.u32 %v1617, 7
    %v1619 = vadd.s32 %v1618, 40
    %1620 = vset.pattern.permute.xlu0 %v1619
    %1621 = vperm.xlu0 %1620, %v1616
    %v1622 = vpop.permute.xlu0 %1621
    %v1623 = vperm.slane %v1237, 2
    %v1624 = vlaneseq
    %v1625 = vshrl.u32 %v1624, 7
    %v1626 = vadd.s32 %v1625, 40
    %1627 = vset.pattern.permute.xlu0 %v1626
    %1628 = vperm.xlu0 %1627, %v1623
    %v1629 = vpop.permute.xlu0 %1628
    %v1630 = vperm.slane %v1237, 3
    %v1631 = vlaneseq
    %v1632 = vshrl.u32 %v1631, 7
    %v1633 = vadd.s32 %v1632, 40
    %1634 = vset.pattern.permute.xlu0 %v1633
    %1635 = vperm.xlu0 %1634, %v1630
    %v1636 = vpop.permute.xlu0 %1635
    %v1637 = vperm.slane %v1238, 0
    %v1638 = vlaneseq
    %v1639 = vshrl.u32 %v1638, 7
    %v1640 = vadd.s32 %v1639, 40
    %1641 = vset.pattern.permute.xlu0 %v1640
    %1642 = vperm.xlu0 %1641, %v1637
    %v1643 = vpop.permute.xlu0 %1642
    %v1644 = vperm.slane %v1238, 1
    %v1645 = vlaneseq
    %v1646 = vshrl.u32 %v1645, 7
    %v1647 = vadd.s32 %v1646, 40
    %1648 = vset.pattern.permute.xlu0 %v1647
    %1649 = vperm.xlu0 %1648, %v1644
    %v1650 = vpop.permute.xlu0 %1649
    %v1651 = vperm.slane %v1238, 2
    %v1652 = vlaneseq
    %v1653 = vshrl.u32 %v1652, 7
    %v1654 = vadd.s32 %v1653, 40
    %1655 = vset.pattern.permute.xlu0 %v1654
    %1656 = vperm.xlu0 %1655, %v1651
    %v1657 = vpop.permute.xlu0 %1656
    %v1658 = vperm.slane %v1238, 3
    %v1659 = vlaneseq
    %v1660 = vshrl.u32 %v1659, 7
    %v1661 = vadd.s32 %v1660, 40
    %1662 = vset.pattern.permute.xlu0 %v1661
    %1663 = vperm.xlu0 %1662, %v1658
    %v1664 = vpop.permute.xlu0 %1663
    %v1665 = vperm.slane %v1239, 0
    %v1666 = vlaneseq
    %v1667 = vshrl.u32 %v1666, 7
    %v1668 = vadd.s32 %v1667, 40
    %1669 = vset.pattern.permute.xlu0 %v1668
    %1670 = vperm.xlu0 %1669, %v1665
    %v1671 = vpop.permute.xlu0 %1670
    %v1672 = vperm.slane %v1239, 1
    %v1673 = vlaneseq
    %v1674 = vshrl.u32 %v1673, 7
    %v1675 = vadd.s32 %v1674, 40
    %1676 = vset.pattern.permute.xlu0 %v1675
    %1677 = vperm.xlu0 %1676, %v1672
    %v1678 = vpop.permute.xlu0 %1677
    %v1679 = vperm.slane %v1239, 2
    %v1680 = vlaneseq
    %v1681 = vshrl.u32 %v1680, 7
    %v1682 = vadd.s32 %v1681, 40
    %1683 = vset.pattern.permute.xlu0 %v1682
    %1684 = vperm.xlu0 %1683, %v1679
    %v1685 = vpop.permute.xlu0 %1684
    %v1686 = vperm.slane %v1239, 3
    %v1687 = vlaneseq
    %v1688 = vshrl.u32 %v1687, 7
    %v1689 = vadd.s32 %v1688, 40
    %1690 = vset.pattern.permute.xlu0 %v1689
    %1691 = vperm.xlu0 %1690, %v1686
    %v1692 = vpop.permute.xlu0 %1691
    %v1693 = vperm.slane %v1240, 0
    %v1694 = vlaneseq
    %v1695 = vshrl.u32 %v1694, 7
    %v1696 = vadd.s32 %v1695, 40
    %1697 = vset.pattern.permute.xlu0 %v1696
    %1698 = vperm.xlu0 %1697, %v1693
    %v1699 = vpop.permute.xlu0 %1698
    %v1700 = vperm.slane %v1240, 1
    %v1701 = vlaneseq
    %v1702 = vshrl.u32 %v1701, 7
    %v1703 = vadd.s32 %v1702, 40
    %1704 = vset.pattern.permute.xlu0 %v1703
    %1705 = vperm.xlu0 %1704, %v1700
    %v1706 = vpop.permute.xlu0 %1705
    %v1707 = vperm.slane %v1240, 2
    %v1708 = vlaneseq
    %v1709 = vshrl.u32 %v1708, 7
    %v1710 = vadd.s32 %v1709, 40
    %1711 = vset.pattern.permute.xlu0 %v1710
    %1712 = vperm.xlu0 %1711, %v1707
    %v1713 = vpop.permute.xlu0 %1712
    %v1714 = vperm.slane %v1240, 3
    %v1715 = vlaneseq
    %v1716 = vshrl.u32 %v1715, 7
    %v1717 = vadd.s32 %v1716, 40
    %1718 = vset.pattern.permute.xlu0 %v1717
    %1719 = vperm.xlu0 %1718, %v1714
    %v1720 = vpop.permute.xlu0 %1719
    %v1721 = vsel %vm1465, %v1503, 0.0
    %v1722 = vsel %vm1466, %v1510, 0.0
    %v1723 = vsel %vm1467, %v1517, 0.0
    %v1724 = vsel %vm1468, %v1524, 0.0
    %v1725 = vsel %vm1469, %v1531, 0.0
    %v1726 = vsel %vm1470, %v1538, 0.0
    %v1727 = vsel %vm1471, %v1545, 0.0
    %v1728 = vsel %vm1472, %v1552, 0.0
    %v1729 = vsel %vm1473, %v1559, 0.0
    %v1730 = vsel %vm1474, %v1566, 0.0
    %v1731 = vsel %vm1475, %v1573, 0.0
    %v1732 = vsel %vm1476, %v1580, 0.0
    %v1733 = vsel %vm1477, %v1587, 0.0
    %v1734 = vsel %vm1478, %v1594, 0.0
    %v1735 = vsel %vm1479, %v1601, 0.0
    %v1736 = vsel %vm1480, %v1608, 0.0
    %v1737 = vsel %vm1481, %v1615, 0.0
    %v1738 = vsel %vm1482, %v1622, 0.0
    %v1739 = vsel %vm1483, %v1629, 0.0
    %v1740 = vsel %vm1484, %v1636, 0.0
    %v1741 = vsel %vm1485, %v1643, 0.0
    %v1742 = vsel %vm1486, %v1650, 0.0
    %v1743 = vsel %vm1487, %v1657, 0.0
    %v1744 = vsel %vm1488, %v1664, 0.0
    %v1745 = vsel %vm1489, %v1671, 0.0
    %v1746 = vsel %vm1490, %v1678, 0.0
    %v1747 = vsel %vm1491, %v1685, 0.0
    %v1748 = vsel %vm1492, %v1692, 0.0
    %v1749 = vsel %vm1493, %v1699, 0.0
    %v1750 = vsel %vm1494, %v1706, 0.0
    %v1751 = vsel %vm1495, %v1713, 0.0
    %v1752 = vsel %vm1496, %v1720, 0.0
    %v1753 = vadd.f32 %v1721, %v1722
    %v1754 = vadd.f32 %v1753, %v1723
    %v1755 = vadd.f32 %v1754, %v1724
    %v1756 = vrot.slane %v1755, 4
    %v1757 = vadd.f32 %v1755, %v1756
    %v1758 = vrot.slane %v1757, 2
    %v1759 = vadd.f32 %v1757, %v1758
    %v1760 = vrot.slane %v1759, 1
    %v1761 = vadd.f32 %v1759, %v1760
    %v1762 = vadd.f32 %v1725, %v1726
    %v1763 = vadd.f32 %v1762, %v1727
    %v1764 = vadd.f32 %v1763, %v1728
    %v1765 = vrot.slane %v1764, 4
    %v1766 = vadd.f32 %v1764, %v1765
    %v1767 = vrot.slane %v1766, 2
    %v1768 = vadd.f32 %v1766, %v1767
    %v1769 = vrot.slane %v1768, 1
    %v1770 = vadd.f32 %v1768, %v1769
    %v1771 = vadd.f32 %v1729, %v1730
    %v1772 = vadd.f32 %v1771, %v1731
    %v1773 = vadd.f32 %v1772, %v1732
    %v1774 = vrot.slane %v1773, 4
    %v1775 = vadd.f32 %v1773, %v1774
    %v1776 = vrot.slane %v1775, 2
    %v1777 = vadd.f32 %v1775, %v1776
    %v1778 = vrot.slane %v1777, 1
    %v1779 = vadd.f32 %v1777, %v1778
    %v1780 = vadd.f32 %v1733, %v1734
    %v1781 = vadd.f32 %v1780, %v1735
    %v1782 = vadd.f32 %v1781, %v1736
    %v1783 = vrot.slane %v1782, 4
    %v1784 = vadd.f32 %v1782, %v1783
    %v1785 = vrot.slane %v1784, 2
    %v1786 = vadd.f32 %v1784, %v1785
    %v1787 = vrot.slane %v1786, 1
    %v1788 = vadd.f32 %v1786, %v1787
    %v1789 = vadd.f32 %v1737, %v1738
    %v1790 = vadd.f32 %v1789, %v1739
    %v1791 = vadd.f32 %v1790, %v1740
    %v1792 = vrot.slane %v1791, 4
    %v1793 = vadd.f32 %v1791, %v1792
    %v1794 = vrot.slane %v1793, 2
    %v1795 = vadd.f32 %v1793, %v1794
    %v1796 = vrot.slane %v1795, 1
    %v1797 = vadd.f32 %v1795, %v1796
    %v1798 = vadd.f32 %v1741, %v1742
    %v1799 = vadd.f32 %v1798, %v1743
    %v1800 = vadd.f32 %v1799, %v1744
    %v1801 = vrot.slane %v1800, 4
    %v1802 = vadd.f32 %v1800, %v1801
    %v1803 = vrot.slane %v1802, 2
    %v1804 = vadd.f32 %v1802, %v1803
    %v1805 = vrot.slane %v1804, 1
    %v1806 = vadd.f32 %v1804, %v1805
    %v1807 = vadd.f32 %v1745, %v1746
    %v1808 = vadd.f32 %v1807, %v1747
    %v1809 = vadd.f32 %v1808, %v1748
    %v1810 = vrot.slane %v1809, 4
    %v1811 = vadd.f32 %v1809, %v1810
    %v1812 = vrot.slane %v1811, 2
    %v1813 = vadd.f32 %v1811, %v1812
    %v1814 = vrot.slane %v1813, 1
    %v1815 = vadd.f32 %v1813, %v1814
    %v1816 = vadd.f32 %v1749, %v1750
    %v1817 = vadd.f32 %v1816, %v1751
    %v1818 = vadd.f32 %v1817, %v1752
    %v1819 = vrot.slane %v1818, 4
    %v1820 = vadd.f32 %v1818, %v1819
    %v1821 = vrot.slane %v1820, 2
    %v1822 = vadd.f32 %v1820, %v1821
    %v1823 = vrot.slane %v1822, 1
    %v1824 = vadd.f32 %v1822, %v1823
    %v1833 = vadd.f32 %v1761, %v76
    %v1834 = vadd.f32 %v1770, %v597
    %v1835 = vadd.f32 %v1779, %v598
    %v1836 = vadd.f32 %v1788, %v599
    %v1837 = vadd.f32 %v1797, %v600
    %v1838 = vadd.f32 %v1806, %v601
    %v1839 = vadd.f32 %v1815, %v602
    %v1840 = vadd.f32 %v1824, %v603
    %v1849 = vrot.slane %v1834, 7
    %v1850 = vsel %vm1198, %v1849, %v1833
    %v1851 = vrot.slane %v1835, 6
    %v1852 = vsel %vm1200, %v1851, %v1850
    %v1853 = vrot.slane %v1836, 5
    %v1854 = vsel %vm1202, %v1853, %v1852
    %v1855 = vrot.slane %v1837, 4
    %vm1856 = vcmask 1044484
    %v1857 = vsel %vm1856, %v1855, %v1854
    %v1858 = vrot.slane %v1838, 3
    %vm1859 = vcmask 1045509
    %v1860 = vsel %vm1859, %v1858, %v1857
    %v1861 = vrot.slane %v1839, 2
    %vm1862 = vcmask 1046534
    %v1863 = vsel %vm1862, %v1861, %v1860
    %v1864 = vrot.slane %v1840, 1
    %vm1865 = vcmask 1047559
    %v1866 = vsel %vm1865, %v1864, %v1863
    %1868 = vst [vmem:[#allocation7] sm:$0xff] %v1866
    // Predicated region
    $region22: #{tpu_custom_call.1} parent=1 // pred_check
      _
    $region23: #{tpu_custom_call.1} parent=1 // pred_check_branch
      %1870 = sbr.rel (0) target = $region25
    $region24: #{tpu_custom_call.1} parent=1 // pred_region
      %1872 = vsyncadd [#allocation4], 0
      %s1874 = sshll.u32 [#allocation7], 4
      %s1875 = int_to_ptr.vmem [resolvable:$true] %s1874
      %s1876 = sshll.u32 %s3, 4
      %s1877 = int_to_ptr.hbm [resolvable:$true] %s1876
      %1879 = dma.vmem_to_hbm [thread:$0]  %s1875, 128, %s1877, [#allocation4]
    $region25: #{tpu_custom_call.1} parent=1 // pred_fallthru
      _
    // Predicated region
    $region26: #{tpu_custom_call.1} parent=1 // pred_check
      _
    $region27: #{tpu_custom_call.1} parent=1 // pred_check_branch
      %1881 = sbr.rel (0) target = $region29
    $region28: #{tpu_custom_call.1} parent=1 // pred_region
      %1883 = dma.done [#allocation4], 128
    $region29: #{tpu_custom_call.1} parent=1 // pred_fallthru
      _
    %1884 = vsyncpa [#allocation3], 1
    %1885 = vsyncpa [#allocation6], 1
    %1886 = vsyncpa [#allocation4], 1

</llo_original>
